<compile_context>
chip_gen: v6e
topology: v6e:2x2x1
jax: 0.10.0
libtpu: 0.0.40
codegen_flags: <defaults>
</compile_context>

<pallas_src>
import numpy as np
import jax
import jax.numpy as jnp
from jax import lax
from jax.experimental import pallas as pl
from jax.experimental.pallas import tpu as pltpu


def mil_kernel(x_ref,                        # (BB*S_pad, F)   matmul dtype
               len_ref,                      # (BB, 1)         int32
               w_enc_ref, b_enc_ref,         # (F, H) mm,      (1, H) f32
               w_a1_ref, b_a1_ref,           # (H, L) mm,      (1, L) f32
               w_a2_ref,                     # (1, L) f32      (VPU operand)
               w_head_ref, b_head_ref,       # (H, n_out) mm,  (1, n_out) f32
               out_ref):                     # (BB, n_out)     f32
    R = x_ref.shape[0]                       # BB * S_pad (MXU M dimension)
    BB = len_ref.shape[0]
    S = R // BB
    H = w_enc_ref.shape[1]

    # encoder: Linear(F, 256) + ReLU   (MXU, f32 accumulation)
    x = x_ref[...]
    emb = jnp.dot(x, w_enc_ref[...], preferred_element_type=jnp.float32)
    emb = jnp.maximum(emb + b_enc_ref[...], 0.0)                 # (R, H) f32

    # attention layer 1: Linear(256, 128) + Tanh  (MXU + EUP tanh)
    h = jnp.dot(emb.astype(w_a1_ref.dtype), w_a1_ref[...],
                preferred_element_type=jnp.float32) + b_a1_ref[...]
    h = jnp.tanh(h)                                              # (R, L) f32

    # attention layer 2: Linear(128, 1) on the VPU (broadcast mult + lane
    # reduce) instead of an N=1 MXU matmul.  b_a2 is dropped: it is added
    # before a softmax, which is shift-invariant, so it is dead math.
    att = jnp.sum(h * w_a2_ref[...], axis=-1, keepdims=True)     # (R, 1)

    # length masking + softmax over the bag dimension, with S kept on the
    # sublane axis (free regroup since S_pad % 8 == 0 — no lane relayout).
    att3 = att.reshape(BB, S, 1)                                  # (BB, S, 1)
    idx = lax.broadcasted_iota(jnp.int32, (BB, S, 1), 1)
    lens3 = len_ref[...].reshape(BB, 1, 1)                        # (BB, 1, 1)
    masked = jnp.where(idx < lens3, att3, jnp.full_like(att3, -1e10))
    m = jnp.max(masked, axis=1, keepdims=True)
    e = jnp.exp(masked - m)
    denom = jnp.sum(e, axis=1, keepdims=True)
    sm = e * pl.reciprocal(denom, approx=True)                    # (BB, S, 1)

    # attention-weighted pooling: lane-broadcast the (R,1) column over emb,
    # then per-bag sublane reduction.
    weighted = (sm.reshape(R, 1) * emb).reshape(BB, S, H).sum(axis=1)  # (BB, H)

    # head: Linear(256, n_out) + sigmoid (exact divide — tiny tensor).
    logits = jnp.dot(weighted.astype(w_head_ref.dtype), w_head_ref[...],
                     preferred_element_type=jnp.float32) + b_head_ref[...]
    out_ref[...] = 1.0 / (1.0 + jnp.exp(-logits))


def mil_forward(bags, lens, params, *, matmul_dtype=jnp.bfloat16,
                target_rows=2048, vmem_budget_bytes=28 << 20,
                vmem_limit_bytes=48 << 20):
    """bags: (B, S, F) f32, lens: (B,) int -> (B, n_out) f32.

    matmul_dtype: bf16 by default on ALL chips — the kernel is bags-stream
      (HBM) bound, bf16 halves those bytes and the per-tile VMEM; all
      elementwise / transcendental math stays f32 (accumulation is f32).
    target_rows: desired MXU M per grid step (BB * S_pad); large tiles
      amortize the ~0.35 us per-grid-step overhead.  The actual tile is
      shrunk to fit vmem_budget_bytes (keep the budget + headroom below
      v7x's 64 MiB physical VMEM; vmem_limit_bytes raises the scoped limit
      above v5e's small default).
    """
    B, S, F = bags.shape
    w_enc, b_enc, w_a1, b_a1, w_a2, b_a2, w_head, b_head = params
    H = w_enc.shape[1]
    L = w_a1.shape[1]
    n_out = w_head.shape[1]
    mm_bytes = jnp.dtype(matmul_dtype).itemsize

    # Pad S (not F!) to a multiple of 8 so in-kernel reshapes between
    # (BB*S_pad, .) and (BB, S_pad, .) are pure sublane regroupings.
    S_pad = max(8, ((S + 7) // 8) * 8)

    # ---- choose BB (bags per grid step) against the VMEM budget ----
    def step_bytes(bb):
        rows = bb * S_pad
        bags_buf = 2 * rows * F * mm_bytes                      # double-buffered
        interm = rows * (4 * H + 4 * L + mm_bytes * H + 4 * H)  # emb, h, cast, pool
        weights = (F * H + H * L + H * n_out) * mm_bytes + 4 * (H + 2 * L + n_out)
        return bags_buf + interm + weights

    BB = max(8, (target_rows // S_pad // 8) * 8)
    while BB > 8 and step_bytes(BB) > vmem_budget_bytes:
        BB = max(8, ((BB // 2) // 8) * 8)
    # v7x megacore: keep >= 2 grid steps when the batch allows it.
    while BB > 8 and (B + BB - 1) // BB < 2:
        BB = max(8, ((BB // 2) // 8) * 8)
    # TODO(synk): for huge S*F where even BB=8 exceeds the budget, split the
    # bag (S) axis across grid steps as an "arbitrary" reduction axis.

    B_pad = ((B + BB - 1) // BB) * BB
    grid = (B_pad // BB,)

    # Cast first (halves the pad writes for bf16), pad only B / S — no F-padded
    # HBM copy; the flatten to 2D is a free metadata reshape.
    bags_c = bags.astype(matmul_dtype)
    if B_pad != B or S_pad != S:
        bags_c = jnp.pad(bags_c, ((0, B_pad - B), (0, S_pad - S), (0, 0)))
    bags_flat = bags_c.reshape(B_pad * S_pad, F)

    lens_p = jnp.zeros((B_pad, 1), jnp.int32).at[:B, 0].set(lens.astype(jnp.int32))

    w_enc_c = w_enc.astype(matmul_dtype)
    w_a1_c = w_a1.astype(matmul_dtype)
    w_head_c = w_head.astype(matmul_dtype)
    w_a2_row = w_a2.reshape(1, L).astype(jnp.float32)   # VPU operand stays f32
    b_enc_f = b_enc.reshape(1, H).astype(jnp.float32)
    b_a1_f = b_a1.reshape(1, L).astype(jnp.float32)
    b_head_f = b_head.reshape(1, n_out).astype(jnp.float32)
    # b_a2 intentionally unused: softmax shift-invariance makes it a no-op.

    def build(single_buffer_weights):
        pm = {"pipeline_mode": pl.Buffered(1)} if single_buffer_weights else {}
        in_specs = [
            pl.BlockSpec((BB * S_pad, F), lambda i: (i, 0)),          # bags tile
            pl.BlockSpec((BB, 1),         lambda i: (i, 0)),          # lens tile
            pl.BlockSpec((F, H),          lambda i: (0, 0), **pm),    # w_enc
            pl.BlockSpec((1, H),          lambda i: (0, 0), **pm),    # b_enc
            pl.BlockSpec((H, L),          lambda i: (0, 0), **pm),    # w_a1
            pl.BlockSpec((1, L),          lambda i: (0, 0), **pm),    # b_a1
            pl.BlockSpec((1, L),          lambda i: (0, 0), **pm),    # w_a2 row
            pl.BlockSpec((H, n_out),      lambda i: (0, 0), **pm),    # w_head
            pl.BlockSpec((1, n_out),      lambda i: (0, 0), **pm),    # b_head
        ]
        return pl.pallas_call(
            mil_kernel,
            out_shape=jax.ShapeDtypeStruct((B_pad, n_out), jnp.float32),
            grid=grid,
            in_specs=in_specs,
            out_specs=pl.BlockSpec((BB, n_out), lambda i: (i, 0)),
            compiler_params=pltpu.CompilerParams(
                dimension_semantics=("parallel",),
                vmem_limit_bytes=vmem_limit_bytes),
        )

    args = (bags_flat, lens_p, w_enc_c, b_enc_f, w_a1_c, b_a1_f,
            w_a2_row, w_head_c, b_head_f)
    try:
        out = build(True)(*args)
    except Exception:
        # Fallback if this jax build rejects pipeline_mode=Buffered(1).
        out = build(False)(*args)
    return out[:B]


def mil_reference(bags, lens, params):
    """Pure-JAX reference matching the PyTorch module."""
    w_enc, b_enc, w_a1, b_a1, w_a2, b_a2, w_head, b_head = params
    emb = jnp.maximum(bags @ w_enc + b_enc, 0.0)                     # (B,S,H)
    att = jnp.tanh(emb @ w_a1 + b_a1) @ w_a2 + b_a2                  # (B,S,1)
    S = bags.shape[1]
    idx = jnp.arange(S)[None, :]                                     # (1,S)
    mask = (idx < lens[:, None])[..., None]                          # (B,S,1)
    masked = jnp.where(mask, att, jnp.full_like(att, -1e10))
    sm = jax.nn.softmax(masked, axis=1)
    weighted = jnp.sum(sm * emb, axis=-2)                            # (B,H)
    return jax.nn.sigmoid(weighted @ w_head + b_head)                # (B,n_out)


def init_params(key, n_feats, n_out, hidden=256, latent=128):
    ks = jax.random.split(key, 8)
    def lin(kw, kb, fan_in, fan_out):
        bound = 1.0 / np.sqrt(fan_in)
        w = jax.random.uniform(kw, (fan_in, fan_out), jnp.float32, -bound, bound)
        b = jax.random.uniform(kb, (1, fan_out), jnp.float32, -bound, bound)
        return w, b
    w_enc, b_enc = lin(ks[0], ks[1], n_feats, hidden)
    w_a1, b_a1 = lin(ks[2], ks[3], hidden, latent)
    w_a2, b_a2 = lin(ks[4], ks[5], latent, 1)
    w_head, b_head = lin(ks[6], ks[7], hidden, n_out)
    return (w_enc, b_enc, w_a1, b_a1, w_a2, b_a2, w_head, b_head)


if __name__ == "__main__":
    B, S, F, n_out = 2, 8, 32, 4
    key = jax.random.PRNGKey(0)
    k_bags, k_params = jax.random.split(key)

    bags = jax.random.normal(k_bags, (B, S, F), jnp.float32)
    lens = jnp.array([5, 8], dtype=jnp.int32)   # true bag sizes (zero-padded bags)
    params = init_params(k_params, F, n_out)

    ref = mil_reference(bags, lens, params)

    # Default path: bf16 MXU operands, f32 accumulation (all chips).
    out_bf16 = jax.block_until_ready(mil_forward(bags, lens, params))
    np.testing.assert_allclose(np.asarray(out_bf16), np.asarray(ref),
                               rtol=3e-2, atol=3e-2)

    # Full f32 path (only the approx softmax reciprocal differs from ref).
    out_f32 = jax.block_until_ready(
        mil_forward(bags, lens, params, matmul_dtype=jnp.float32))
    np.testing.assert_allclose(np.asarray(out_f32), np.asarray(ref),
                               rtol=5e-3, atol=5e-3)

    print("KERNEL_OK")
</pallas_src>

<mosaic_0001>
module attributes {stable_mosaic.version = 11 : i64} {
  func.func @mil_kernel(%arg0: i32, %arg1: memref<64x32xbf16, #tpu.memory_space<vmem>>, %arg2: memref<8x1xi32, #tpu.memory_space<vmem>>, %arg3: memref<32x256xbf16, #tpu.memory_space<vmem>>, %arg4: memref<1x256xf32, #tpu.memory_space<vmem>>, %arg5: memref<256x128xbf16, #tpu.memory_space<vmem>>, %arg6: memref<1x128xf32, #tpu.memory_space<vmem>>, %arg7: memref<1x128xf32, #tpu.memory_space<vmem>>, %arg8: memref<256x4xbf16, #tpu.memory_space<vmem>>, %arg9: memref<1x4xf32, #tpu.memory_space<vmem>>, %arg10: memref<8x4xf32, #tpu.memory_space<vmem>>) attributes {dimension_semantics = [#tpu.dimension_semantics<parallel>], iteration_bounds = array<i64: 1>, scalar_prefetch = 0 : i64, scratch_operands = 0 : i64, tpu.core_type = #tpu.core_type<tc>, window_params = [{transform_indices = @transform_0, window_bounds = array<i64: 64, 32>}, {transform_indices = @transform_1, window_bounds = array<i64: 8, 1>}, {pipeline_mode = #tpu.pipeline_mode<synchronous>, transform_indices = @transform_2, window_bounds = array<i64: 32, 256>}, {pipeline_mode = #tpu.pipeline_mode<synchronous>, transform_indices = @transform_3, window_bounds = array<i64: 1, 256>}, {pipeline_mode = #tpu.pipeline_mode<synchronous>, transform_indices = @transform_4, window_bounds = array<i64: 256, 128>}, {pipeline_mode = #tpu.pipeline_mode<synchronous>, transform_indices = @transform_5, window_bounds = array<i64: 1, 128>}, {pipeline_mode = #tpu.pipeline_mode<synchronous>, transform_indices = @transform_6, window_bounds = array<i64: 1, 128>}, {pipeline_mode = #tpu.pipeline_mode<synchronous>, transform_indices = @transform_7, window_bounds = array<i64: 256, 4>}, {pipeline_mode = #tpu.pipeline_mode<synchronous>, transform_indices = @transform_8, window_bounds = array<i64: 1, 4>}, {transform_indices = @transform_9, window_bounds = array<i64: 8, 4>}]} {
    %c0 = arith.constant 0 : index
    %c0_0 = arith.constant 0 : index
    %0 = vector.load %arg1[%c0, %c0_0] : memref<64x32xbf16, #tpu.memory_space<vmem>>, vector<64x32xbf16>
    %c0_1 = arith.constant 0 : index
    %c0_2 = arith.constant 0 : index
    %1 = vector.load %arg3[%c0_1, %c0_2] : memref<32x256xbf16, #tpu.memory_space<vmem>>, vector<32x256xbf16>
    %cst = arith.constant dense<0.000000e+00> : vector<64x256xf32>
    %2 = tpu.matmul %0, %1, %cst {dimension_numbers = #tpu.dot_dimension_numbers<[1], [0], [0], [1], [0, 0, 1, 1], [], []>} : vector<64x32xbf16>, vector<32x256xbf16>, vector<64x256xf32> -> vector<64x256xf32>
    %c0_3 = arith.constant 0 : index
    %c0_4 = arith.constant 0 : index
    %3 = vector.load %arg4[%c0_3, %c0_4] : memref<1x256xf32, #tpu.memory_space<vmem>>, vector<1x256xf32>
    %4 = vector.broadcast %3 : vector<1x256xf32> to vector<64x256xf32>
    %5 = arith.addf %2, %4 : vector<64x256xf32>
    %cst_5 = arith.constant 0.000000e+00 : f32
    %6 = vector.broadcast %cst_5 : f32 to vector<64x256xf32>
    %7 = arith.maximumf %5, %6 : vector<64x256xf32>
    %8 = arith.truncf %7 : vector<64x256xf32> to vector<64x256xbf16>
    %c0_6 = arith.constant 0 : index
    %c0_7 = arith.constant 0 : index
    %9 = vector.load %arg5[%c0_6, %c0_7] : memref<256x128xbf16, #tpu.memory_space<vmem>>, vector<256x128xbf16>
    %cst_8 = arith.constant dense<0.000000e+00> : vector<64x128xf32>
    %10 = tpu.matmul %8, %9, %cst_8 {dimension_numbers = #tpu.dot_dimension_numbers<[1], [0], [0], [1], [0, 0, 1, 1], [], []>} : vector<64x256xbf16>, vector<256x128xbf16>, vector<64x128xf32> -> vector<64x128xf32>
    %c0_9 = arith.constant 0 : index
    %c0_10 = arith.constant 0 : index
    %11 = vector.load %arg6[%c0_9, %c0_10] : memref<1x128xf32, #tpu.memory_space<vmem>>, vector<1x128xf32>
    %12 = vector.broadcast %11 : vector<1x128xf32> to vector<64x128xf32>
    %13 = arith.addf %10, %12 : vector<64x128xf32>
    %14 = math.tanh %13 : vector<64x128xf32>
    %c0_11 = arith.constant 0 : index
    %c0_12 = arith.constant 0 : index
    %15 = vector.load %arg7[%c0_11, %c0_12] : memref<1x128xf32, #tpu.memory_space<vmem>>, vector<1x128xf32>
    %16 = vector.broadcast %15 : vector<1x128xf32> to vector<64x128xf32>
    %17 = arith.mulf %14, %16 : vector<64x128xf32>
    %cst_13 = arith.constant dense<0.000000e+00> : vector<64xf32>
    %18 = vector.multi_reduction <add>, %17, %cst_13 [1] : vector<64x128xf32> to vector<64xf32>
    %19 = vector.shape_cast %18 : vector<64xf32> to vector<64x1xf32>
    %20 = vector.shape_cast %19 : vector<64x1xf32> to vector<8x8x1xf32>
    %21 = tpu.iota {dimensions = array<i32: 1>} : vector<8x8x1xi32>
    %c0_14 = arith.constant 0 : index
    %c0_15 = arith.constant 0 : index
    %22 = vector.load %arg2[%c0_14, %c0_15] : memref<8x1xi32, #tpu.memory_space<vmem>>, vector<8x1xi32>
    %23 = vector.shape_cast %22 : vector<8x1xi32> to vector<8x1x1xi32>
    %24 = vector.broadcast %23 : vector<8x1x1xi32> to vector<8x8x1xi32>
    %25 = arith.cmpi slt, %21, %24 : vector<8x8x1xi32>
    %cst_16 = arith.constant -1.000000e+10 : f32
    %26 = vector.broadcast %cst_16 : f32 to vector<8x8x1xf32>
    %27 = arith.select %25, %20, %26 : vector<8x8x1xi1>, vector<8x8x1xf32>
    %cst_17 = arith.constant dense<0xFF800000> : vector<8x1xf32>
    %28 = vector.multi_reduction <maximumf>, %27, %cst_17 [1] : vector<8x8x1xf32> to vector<8x1xf32>
    %29 = vector.shape_cast %28 : vector<8x1xf32> to vector<8x1x1xf32>
    %30 = vector.broadcast %29 : vector<8x1x1xf32> to vector<8x8x1xf32>
    %31 = arith.subf %27, %30 : vector<8x8x1xf32>
    %32 = math.exp %31 : vector<8x8x1xf32>
    %cst_18 = arith.constant dense<0.000000e+00> : vector<8x1xf32>
    %33 = vector.multi_reduction <add>, %32, %cst_18 [1] : vector<8x8x1xf32> to vector<8x1xf32>
    %34 = vector.shape_cast %33 : vector<8x1xf32> to vector<8x1x1xf32>
    %35 = tpu.reciprocal %34 {approx = true} : vector<8x1x1xf32> -> vector<8x1x1xf32>
    %36 = vector.broadcast %35 : vector<8x1x1xf32> to vector<8x8x1xf32>
    %37 = arith.mulf %32, %36 : vector<8x8x1xf32>
    %38 = vector.shape_cast %37 : vector<8x8x1xf32> to vector<64x1xf32>
    %39 = vector.broadcast %38 : vector<64x1xf32> to vector<64x256xf32>
    %40 = arith.mulf %39, %7 : vector<64x256xf32>
    %41 = vector.shape_cast %40 : vector<64x256xf32> to vector<8x8x256xf32>
    %cst_19 = arith.constant dense<0.000000e+00> : vector<8x256xf32>
    %42 = vector.multi_reduction <add>, %41, %cst_19 [1] : vector<8x8x256xf32> to vector<8x256xf32>
    %43 = arith.truncf %42 : vector<8x256xf32> to vector<8x256xbf16>
    %c0_20 = arith.constant 0 : index
    %c0_21 = arith.constant 0 : index
    %44 = vector.load %arg8[%c0_20, %c0_21] : memref<256x4xbf16, #tpu.memory_space<vmem>>, vector<256x4xbf16>
    %cst_22 = arith.constant dense<0.000000e+00> : vector<8x4xf32>
    %45 = tpu.matmul %43, %44, %cst_22 {dimension_numbers = #tpu.dot_dimension_numbers<[1], [0], [0], [1], [0, 0, 1, 1], [], []>} : vector<8x256xbf16>, vector<256x4xbf16>, vector<8x4xf32> -> vector<8x4xf32>
    %c0_23 = arith.constant 0 : index
    %c0_24 = arith.constant 0 : index
    %46 = vector.load %arg9[%c0_23, %c0_24] : memref<1x4xf32, #tpu.memory_space<vmem>>, vector<1x4xf32>
    %47 = vector.broadcast %46 : vector<1x4xf32> to vector<8x4xf32>
    %48 = arith.addf %45, %47 : vector<8x4xf32>
    %cst_25 = arith.constant 0.000000e+00 : f32
    %49 = vector.broadcast %cst_25 : f32 to vector<8x4xf32>
    %50 = arith.subf %49, %48 : vector<8x4xf32>
    %51 = math.exp %50 : vector<8x4xf32>
    %cst_26 = arith.constant 1.000000e+00 : f32
    %52 = vector.broadcast %cst_26 : f32 to vector<8x4xf32>
    %53 = arith.addf %52, %51 : vector<8x4xf32>
    %cst_27 = arith.constant 1.000000e+00 : f32
    %54 = vector.broadcast %cst_27 : f32 to vector<8x4xf32>
    %55 = arith.divf %54, %53 : vector<8x4xf32>
    %c0_28 = arith.constant 0 : index
    %c0_29 = arith.constant 0 : index
    %56 = vector.load %arg10[%c0_28, %c0_29] : memref<8x4xf32, #tpu.memory_space<vmem>>, vector<8x4xf32>
    tpu.vector_store %arg10[%c0_28, %c0_29], %55 {strides = array<i32>} : memref<8x4xf32, #tpu.memory_space<vmem>>, vector<8x4xf32>,
    return
  }
  func.func @transform_0(%arg0: i32) -> (i32, i32) {
    %c0_i32 = arith.constant 0 : i32
    %c0_i32_0 = arith.constant 0 : i32
    return %arg0, %c0_i32 : i32, i32
  }
  func.func @transform_1(%arg0: i32) -> (i32, i32) {
    %c0_i32 = arith.constant 0 : i32
    %c0_i32_0 = arith.constant 0 : i32
    return %arg0, %c0_i32 : i32, i32
  }
  func.func @transform_2(%arg0: i32) -> (i32, i32) {
    %c0_i32 = arith.constant 0 : i32
    %c0_i32_0 = arith.constant 0 : i32
    %c0_i32_1 = arith.constant 0 : i32
    return %c0_i32, %c0_i32_0 : i32, i32
  }
  func.func @transform_3(%arg0: i32) -> (i32, i32) {
    %c0_i32 = arith.constant 0 : i32
    %c0_i32_0 = arith.constant 0 : i32
    %c0_i32_1 = arith.constant 0 : i32
    return %c0_i32, %c0_i32_0 : i32, i32
  }
  func.func @transform_4(%arg0: i32) -> (i32, i32) {
    %c0_i32 = arith.constant 0 : i32
    %c0_i32_0 = arith.constant 0 : i32
    %c0_i32_1 = arith.constant 0 : i32
    return %c0_i32, %c0_i32_0 : i32, i32
  }
  func.func @transform_5(%arg0: i32) -> (i32, i32) {
    %c0_i32 = arith.constant 0 : i32
    %c0_i32_0 = arith.constant 0 : i32
    %c0_i32_1 = arith.constant 0 : i32
    return %c0_i32, %c0_i32_0 : i32, i32
  }
  func.func @transform_6(%arg0: i32) -> (i32, i32) {
    %c0_i32 = arith.constant 0 : i32
    %c0_i32_0 = arith.constant 0 : i32
    %c0_i32_1 = arith.constant 0 : i32
    return %c0_i32, %c0_i32_0 : i32, i32
  }
  func.func @transform_7(%arg0: i32) -> (i32, i32) {
    %c0_i32 = arith.constant 0 : i32
    %c0_i32_0 = arith.constant 0 : i32
    %c0_i32_1 = arith.constant 0 : i32
    return %c0_i32, %c0_i32_0 : i32, i32
  }
  func.func @transform_8(%arg0: i32) -> (i32, i32) {
    %c0_i32 = arith.constant 0 : i32
    %c0_i32_0 = arith.constant 0 : i32
    %c0_i32_1 = arith.constant 0 : i32
    return %c0_i32, %c0_i32_0 : i32, i32
  }
  func.func @transform_9(%arg0: i32) -> (i32, i32) {
    %c0_i32 = arith.constant 0 : i32
    %c0_i32_0 = arith.constant 0 : i32
    return %arg0, %c0_i32 : i32, i32
  }
}

module attributes {stable_mosaic.version = 11 : i64} {
  func.func @mil_kernel(%arg0: i32, %arg1: memref<64x32xbf16, #tpu.memory_space<vmem>>, %arg2: memref<8x1xi32, #tpu.memory_space<vmem>>, %arg3: memref<32x256xbf16, #tpu.memory_space<vmem>>, %arg4: memref<1x256xf32, #tpu.memory_space<vmem>>, %arg5: memref<256x128xbf16, #tpu.memory_space<vmem>>, %arg6: memref<1x128xf32, #tpu.memory_space<vmem>>, %arg7: memref<1x128xf32, #tpu.memory_space<vmem>>, %arg8: memref<256x4xbf16, #tpu.memory_space<vmem>>, %arg9: memref<1x4xf32, #tpu.memory_space<vmem>>, %arg10: memref<8x4xf32, #tpu.memory_space<vmem>>) attributes {dimension_semantics = [#tpu.dimension_semantics<parallel>], iteration_bounds = array<i64: 1>, scalar_prefetch = 0 : i64, scratch_operands = 0 : i64, tpu.core_type = #tpu.core_type<tc>, window_params = [{transform_indices = @transform_0, window_bounds = array<i64: 64, 32>}, {transform_indices = @transform_1, window_bounds = array<i64: 8, 1>}, {pipeline_mode = #tpu.pipeline_mode<synchronous>, transform_indices = @transform_2, window_bounds = array<i64: 32, 256>}, {pipeline_mode = #tpu.pipeline_mode<synchronous>, transform_indices = @transform_3, window_bounds = array<i64: 1, 256>}, {pipeline_mode = #tpu.pipeline_mode<synchronous>, transform_indices = @transform_4, window_bounds = array<i64: 256, 128>}, {pipeline_mode = #tpu.pipeline_mode<synchronous>, transform_indices = @transform_5, window_bounds = array<i64: 1, 128>}, {pipeline_mode = #tpu.pipeline_mode<synchronous>, transform_indices = @transform_6, window_bounds = array<i64: 1, 128>}, {pipeline_mode = #tpu.pipeline_mode<synchronous>, transform_indices = @transform_7, window_bounds = array<i64: 256, 4>}, {pipeline_mode = #tpu.pipeline_mode<synchronous>, transform_indices = @transform_8, window_bounds = array<i64: 1, 4>}, {transform_indices = @transform_9, window_bounds = array<i64: 8, 4>}]} {
    %c0 = arith.constant 0 : index
    %c0_0 = arith.constant 0 : index
    %0 = vector.load %arg1[%c0, %c0_0] : memref<64x32xbf16, #tpu.memory_space<vmem>>, vector<64x32xbf16>
    %c0_1 = arith.constant 0 : index
    %c0_2 = arith.constant 0 : index
    %1 = vector.load %arg3[%c0_1, %c0_2] : memref<32x256xbf16, #tpu.memory_space<vmem>>, vector<32x256xbf16>
    %cst = arith.constant dense<0.000000e+00> : vector<64x256xf32>
    %2 = tpu.matmul %0, %1, %cst {dimension_numbers = #tpu.dot_dimension_numbers<[1], [0], [0], [1], [0, 0, 1, 1], [], []>} : vector<64x32xbf16>, vector<32x256xbf16>, vector<64x256xf32> -> vector<64x256xf32>
    %c0_3 = arith.constant 0 : index
    %c0_4 = arith.constant 0 : index
    %3 = vector.load %arg4[%c0_3, %c0_4] : memref<1x256xf32, #tpu.memory_space<vmem>>, vector<1x256xf32>
    %4 = vector.broadcast %3 : vector<1x256xf32> to vector<64x256xf32>
    %5 = arith.addf %2, %4 : vector<64x256xf32>
    %cst_5 = arith.constant 0.000000e+00 : f32
    %6 = vector.broadcast %cst_5 : f32 to vector<64x256xf32>
    %7 = arith.maximumf %5, %6 : vector<64x256xf32>
    %8 = arith.truncf %7 : vector<64x256xf32> to vector<64x256xbf16>
    %c0_6 = arith.constant 0 : index
    %c0_7 = arith.constant 0 : index
    %9 = vector.load %arg5[%c0_6, %c0_7] : memref<256x128xbf16, #tpu.memory_space<vmem>>, vector<256x128xbf16>
    %cst_8 = arith.constant dense<0.000000e+00> : vector<64x128xf32>
    %10 = tpu.matmul %8, %9, %cst_8 {dimension_numbers = #tpu.dot_dimension_numbers<[1], [0], [0], [1], [0, 0, 1, 1], [], []>} : vector<64x256xbf16>, vector<256x128xbf16>, vector<64x128xf32> -> vector<64x128xf32>
    %c0_9 = arith.constant 0 : index
    %c0_10 = arith.constant 0 : index
    %11 = vector.load %arg6[%c0_9, %c0_10] : memref<1x128xf32, #tpu.memory_space<vmem>>, vector<1x128xf32>
    %12 = vector.broadcast %11 : vector<1x128xf32> to vector<64x128xf32>
    %13 = arith.addf %10, %12 : vector<64x128xf32>
    %14 = math.tanh %13 : vector<64x128xf32>
    %c0_11 = arith.constant 0 : index
    %c0_12 = arith.constant 0 : index
    %15 = vector.load %arg7[%c0_11, %c0_12] : memref<1x128xf32, #tpu.memory_space<vmem>>, vector<1x128xf32>
    %16 = vector.broadcast %15 : vector<1x128xf32> to vector<64x128xf32>
    %17 = arith.mulf %14, %16 : vector<64x128xf32>
    %cst_13 = arith.constant dense<0.000000e+00> : vector<64xf32>
    %18 = vector.multi_reduction <add>, %17, %cst_13 [1] : vector<64x128xf32> to vector<64xf32>
    %19 = vector.shape_cast %18 : vector<64xf32> to vector<64x1xf32>
    %20 = vector.shape_cast %19 : vector<64x1xf32> to vector<8x8x1xf32>
    %21 = tpu.iota {dimensions = array<i32: 1>} : vector<8x8x1xi32>
    %c0_14 = arith.constant 0 : index
    %c0_15 = arith.constant 0 : index
    %22 = vector.load %arg2[%c0_14, %c0_15] : memref<8x1xi32, #tpu.memory_space<vmem>>, vector<8x1xi32>
    %23 = vector.shape_cast %22 : vector<8x1xi32> to vector<8x1x1xi32>
    %24 = vector.broadcast %23 : vector<8x1x1xi32> to vector<8x8x1xi32>
    %25 = arith.cmpi slt, %21, %24 : vector<8x8x1xi32>
    %cst_16 = arith.constant -1.000000e+10 : f32
    %26 = vector.broadcast %cst_16 : f32 to vector<8x8x1xf32>
    %27 = arith.select %25, %20, %26 : vector<8x8x1xi1>, vector<8x8x1xf32>
    %cst_17 = arith.constant dense<0xFF800000> : vector<8x1xf32>
    %28 = vector.multi_reduction <maximumf>, %27, %cst_17 [1] : vector<8x8x1xf32> to vector<8x1xf32>
    %29 = vector.shape_cast %28 : vector<8x1xf32> to vector<8x1x1xf32>
    %30 = vector.broadcast %29 : vector<8x1x1xf32> to vector<8x8x1xf32>
    %31 = arith.subf %27, %30 : vector<8x8x1xf32>
    %32 = math.exp %31 : vector<8x8x1xf32>
    %cst_18 = arith.constant dense<0.000000e+00> : vector<8x1xf32>
    %33 = vector.multi_reduction <add>, %32, %cst_18 [1] : vector<8x8x1xf32> to vector<8x1xf32>
    %34 = vector.shape_cast %33 : vector<8x1xf32> to vector<8x1x1xf32>
    %35 = tpu.reciprocal %34 {approx = true} : vector<8x1x1xf32> -> vector<8x1x1xf32>
    %36 = vector.broadcast %35 : vector<8x1x1xf32> to vector<8x8x1xf32>
    %37 = arith.mulf %32, %36 : vector<8x8x1xf32>
    %38 = vector.shape_cast %37 : vector<8x8x1xf32> to vector<64x1xf32>
    %39 = vector.broadcast %38 : vector<64x1xf32> to vector<64x256xf32>
    %40 = arith.mulf %39, %7 : vector<64x256xf32>
    %41 = vector.shape_cast %40 : vector<64x256xf32> to vector<8x8x256xf32>
    %cst_19 = arith.constant dense<0.000000e+00> : vector<8x256xf32>
    %42 = vector.multi_reduction <add>, %41, %cst_19 [1] : vector<8x8x256xf32> to vector<8x256xf32>
    %43 = arith.truncf %42 : vector<8x256xf32> to vector<8x256xbf16>
    %c0_20 = arith.constant 0 : index
    %c0_21 = arith.constant 0 : index
    %44 = vector.load %arg8[%c0_20, %c0_21] : memref<256x4xbf16, #tpu.memory_space<vmem>>, vector<256x4xbf16>
    %cst_22 = arith.constant dense<0.000000e+00> : vector<8x4xf32>
    %45 = tpu.matmul %43, %44, %cst_22 {dimension_numbers = #tpu.dot_dimension_numbers<[1], [0], [0], [1], [0, 0, 1, 1], [], []>} : vector<8x256xbf16>, vector<256x4xbf16>, vector<8x4xf32> -> vector<8x4xf32>
    %c0_23 = arith.constant 0 : index
    %c0_24 = arith.constant 0 : index
    %46 = vector.load %arg9[%c0_23, %c0_24] : memref<1x4xf32, #tpu.memory_space<vmem>>, vector<1x4xf32>
    %47 = vector.broadcast %46 : vector<1x4xf32> to vector<8x4xf32>
    %48 = arith.addf %45, %47 : vector<8x4xf32>
    %cst_25 = arith.constant 0.000000e+00 : f32
    %49 = vector.broadcast %cst_25 : f32 to vector<8x4xf32>
    %50 = arith.subf %49, %48 : vector<8x4xf32>
    %51 = math.exp %50 : vector<8x4xf32>
    %cst_26 = arith.constant 1.000000e+00 : f32
    %52 = vector.broadcast %cst_26 : f32 to vector<8x4xf32>
    %53 = arith.addf %52, %51 : vector<8x4xf32>
    %cst_27 = arith.constant 1.000000e+00 : f32
    %54 = vector.broadcast %cst_27 : f32 to vector<8x4xf32>
    %55 = arith.divf %54, %53 : vector<8x4xf32>
    %c0_28 = arith.constant 0 : index
    %c0_29 = arith.constant 0 : index
    %56 = vector.load %arg10[%c0_28, %c0_29] : memref<8x4xf32, #tpu.memory_space<vmem>>, vector<8x4xf32>
    tpu.vector_store %arg10[%c0_28, %c0_29], %55 {strides = array<i32>} : memref<8x4xf32, #tpu.memory_space<vmem>>, vector<8x4xf32>,
    return
  }
  func.func @transform_0(%arg0: i32) -> (i32, i32) {
    %c0_i32 = arith.constant 0 : i32
    %c0_i32_0 = arith.constant 0 : i32
    return %arg0, %c0_i32 : i32, i32
  }
  func.func @transform_1(%arg0: i32) -> (i32, i32) {
    %c0_i32 = arith.constant 0 : i32
    %c0_i32_0 = arith.constant 0 : i32
    return %arg0, %c0_i32 : i32, i32
  }
  func.func @transform_2(%arg0: i32) -> (i32, i32) {
    %c0_i32 = arith.constant 0 : i32
    %c0_i32_0 = arith.constant 0 : i32
    %c0_i32_1 = arith.constant 0 : i32
    return %c0_i32, %c0_i32_0 : i32, i32
  }
  func.func @transform_3(%arg0: i32) -> (i32, i32) {
    %c0_i32 = arith.constant 0 : i32
    %c0_i32_0 = arith.constant 0 : i32
    %c0_i32_1 = arith.constant 0 : i32
    return %c0_i32, %c0_i32_0 : i32, i32
  }
  func.func @transform_4(%arg0: i32) -> (i32, i32) {
    %c0_i32 = arith.constant 0 : i32
    %c0_i32_0 = arith.constant 0 : i32
    %c0_i32_1 = arith.constant 0 : i32
    return %c0_i32, %c0_i32_0 : i32, i32
  }
  func.func @transform_5(%arg0: i32) -> (i32, i32) {
    %c0_i32 = arith.constant 0 : i32
    %c0_i32_0 = arith.constant 0 : i32
    %c0_i32_1 = arith.constant 0 : i32
    return %c0_i32, %c0_i32_0 : i32, i32
  }
  func.func @transform_6(%arg0: i32) -> (i32, i32) {
    %c0_i32 = arith.constant 0 : i32
    %c0_i32_0 = arith.constant 0 : i32
    %c0_i32_1 = arith.constant 0 : i32
    return %c0_i32, %c0_i32_0 : i32, i32
  }
  func.func @transform_7(%arg0: i32) -> (i32, i32) {
    %c0_i32 = arith.constant 0 : i32
    %c0_i32_0 = arith.constant 0 : i32
    %c0_i32_1 = arith.constant 0 : i32
    return %c0_i32, %c0_i32_0 : i32, i32
  }
  func.func @transform_8(%arg0: i32) -> (i32, i32) {
    %c0_i32 = arith.constant 0 : i32
    %c0_i32_0 = arith.constant 0 : i32
    %c0_i32_1 = arith.constant 0 : i32
    return %c0_i32, %c0_i32_0 : i32, i32
  }
  func.func @transform_9(%arg0: i32) -> (i32, i32) {
    %c0_i32 = arith.constant 0 : i32
    %c0_i32_0 = arith.constant 0 : i32
    return %arg0, %c0_i32 : i32, i32
  }
}

</mosaic_0001>

<llo_original>
// kernel: tpu_custom_call.1
$region0: #{tpu_custom_call.1}
  #allocation0 [shape = 'u32[]', space=smem, size = 0x4, offset = 0x4, fixed_abs, tag = 'smem constant byte address 0x4 - core index']
  #allocation1 [shape = 'u32[144,128]{1,0:T(1,128)}', space=vmem, size = 0x12000, scoped, tag = 'internal scratch']
  %s0 = inlined_call_operand.vmem [shape: bf16[64,32], index: 0, kind: input, shape index: {}]
  %s1 = inlined_call_operand.vmem [shape: s32[8,1], index: 1, kind: input, shape index: {}]
  %s2 = inlined_call_operand.vmem [shape: bf16[32,256], index: 2, kind: input, shape index: {}]
  %s3 = inlined_call_operand.vmem [shape: f32[1,256], index: 3, kind: input, shape index: {}]
  %s4 = inlined_call_operand.vmem [shape: bf16[256,128], index: 4, kind: input, shape index: {}]
  %s5 = inlined_call_operand.vmem [shape: f32[1,128], index: 5, kind: input, shape index: {}]
  %s6 = inlined_call_operand.vmem [shape: f32[1,128], index: 6, kind: input, shape index: {}]
  %s7 = inlined_call_operand.vmem [shape: bf16[256,4], index: 7, kind: input, shape index: {}]
  %s8 = inlined_call_operand.vmem [shape: f32[1,4], index: 8, kind: input, shape index: {}]
  %s9 = inlined_call_operand.vmem [shape: f32[8,4], index: 9, kind: output, shape index: {}]
  %s10 = sld [smem:[#allocation0]]
  $region46: #{tpu_custom_call.1} parent=0
    _
  %s12 = ssub.s32 1, %s10
  %s13 = scalar_select 0, %s12, %s10
  // Predicated region
  $region2: #{tpu_custom_call.1} parent=0 // pred_check
    _
  $region3: #{tpu_custom_call.1} parent=0 // pred_check_branch
    %15 = sbr.rel (0) target = $region5
  $region4: #{tpu_custom_call.1} parent=0 // pred_region
    _
  $region5: #{tpu_custom_call.1} parent=0 // pred_fallthru
    _
  // Predicated region
  $region6: #{tpu_custom_call.1} parent=0 // pred_check
    _
  $region7: #{tpu_custom_call.1} parent=0 // pred_check_branch
    %17 = sbr.rel (0) target = $region9
  $region8: #{tpu_custom_call.1} parent=0 // pred_region
    _
  $region9: #{tpu_custom_call.1} parent=0 // pred_fallthru
    _
  // Predicated region
  $region10: #{tpu_custom_call.1} parent=0 // pred_check
    _
  $region11: #{tpu_custom_call.1} parent=0 // pred_check_branch
    %19 = sbr.rel (0) target = $region13
  $region12: #{tpu_custom_call.1} parent=0 // pred_region
    _
  $region13: #{tpu_custom_call.1} parent=0 // pred_fallthru
    _
  // Predicated region
  $region14: #{tpu_custom_call.1} parent=0 // pred_check
    _
  $region15: #{tpu_custom_call.1} parent=0 // pred_check_branch
    %21 = sbr.rel (0) target = $region17
  $region16: #{tpu_custom_call.1} parent=0 // pred_region
    _
  $region17: #{tpu_custom_call.1} parent=0 // pred_fallthru
    _
  // Predicated region
  $region18: #{tpu_custom_call.1} parent=0 // pred_check
    _
  $region19: #{tpu_custom_call.1} parent=0 // pred_check_branch
    %23 = sbr.rel (0) target = $region21
  $region20: #{tpu_custom_call.1} parent=0 // pred_region
    _
  $region21: #{tpu_custom_call.1} parent=0 // pred_fallthru
    _
  // Predicated region
  $region22: #{tpu_custom_call.1} parent=0 // pred_check
    _
  $region23: #{tpu_custom_call.1} parent=0 // pred_check_branch
    %25 = sbr.rel (0) target = $region25
  $region24: #{tpu_custom_call.1} parent=0 // pred_region
    _
  $region25: #{tpu_custom_call.1} parent=0 // pred_fallthru
    _
  // Predicated region
  $region26: #{tpu_custom_call.1} parent=0 // pred_check
    _
  $region27: #{tpu_custom_call.1} parent=0 // pred_check_branch
    %27 = sbr.rel (0) target = $region29
  $region28: #{tpu_custom_call.1} parent=0 // pred_region
    _
  $region29: #{tpu_custom_call.1} parent=0 // pred_fallthru
    _
  // Predicated region
  $region30: #{tpu_custom_call.1} parent=0 // pred_check
    _
  $region31: #{tpu_custom_call.1} parent=0 // pred_check_branch
    %29 = sbr.rel (0) target = $region33
  $region32: #{tpu_custom_call.1} parent=0 // pred_region
    _
  $region33: #{tpu_custom_call.1} parent=0 // pred_fallthru
    _
  // Predicated region
  $region34: #{tpu_custom_call.1} parent=0 // pred_check
    _
  $region35: #{tpu_custom_call.1} parent=0 // pred_check_branch
    %31 = sbr.rel (0) target = $region37
  $region36: #{tpu_custom_call.1} parent=0 // pred_region
    _
  $region37: #{tpu_custom_call.1} parent=0 // pred_fallthru
    _
  %v33 = vld [vmem:[%s0] sm:$0xf]
  %v34 = vld [vmem:[%s0 + $0x4] sm:$0xf]
  %v35 = vld [vmem:[%s0 + $0x8] sm:$0xf]
  %v36 = vld [vmem:[%s0 + $0xc] sm:$0xf]
  %v37 = vld [vmem:[%s0 + $0x10] sm:$0xf]
  %v38 = vld [vmem:[%s0 + $0x14] sm:$0xf]
  %v39 = vld [vmem:[%s0 + $0x18] sm:$0xf]
  %v40 = vld [vmem:[%s0 + $0x1c] sm:$0xf]
  %v41 = vld [vmem:[%s2] sm:$0xff]
  %v42 = vld [vmem:[%s2 + $0x8] sm:$0xff]
  %v43 = vld [vmem:[%s2 + $0x10] sm:$0xff]
  %v44 = vld [vmem:[%s2 + $0x18] sm:$0xff]
  %v45 = vld [vmem:[%s3] sm:$0x3]
  %v47 = vlaneseq
  %v48 = vshrl.u32 %v47, 7
  %v49 = vsub.s32 0, %v48
  %v50 = vrot.slane %v45, %v49
  %v51 = vlaneseq
  %v52 = vshrl.u32 %v51, 7
  %v53 = vsub.s32 1, %v52
  %v54 = vrot.slane %v45, %v53
  %v65 = vunpack.c.l.b16 %v33
  %v66 = vunpack.c.l.b16 %v34
  %v67 = vunpack.c.l.b16 %v35
  %v68 = vunpack.c.l.b16 %v36
  %v69 = vunpack.c.l.b16 %v37
  %v70 = vunpack.c.l.b16 %v38
  %v71 = vunpack.c.l.b16 %v39
  %v72 = vunpack.c.l.b16 %v40
  %v73 = vpack.c.b16 %v66, %v65
  %v74 = vpack.c.b16 %v68, %v67
  %v75 = vpack.c.b16 %v70, %v69
  %v76 = vpack.c.b16 %v72, %v71
  %v81 = vunpack.c.l.b16 %v41
  %v82 = vunpack.c.h.b16 %v41
  %v83 = vunpack.c.l.b16 %v42
  %v84 = vunpack.c.h.b16 %v42
  %v85 = vunpack.c.l.b16 %v43
  %v86 = vunpack.c.h.b16 %v43
  %v87 = vunpack.c.l.b16 %v44
  %v88 = vunpack.c.h.b16 %v44
  %v89 = vpack.c.b16 %v83, %v81
  %v90 = vpack.c.b16 %v84, %v82
  %v91 = vpack.c.b16 %v87, %v85
  %v92 = vpack.c.b16 %v88, %v86
  %vm97 = vcmask 261120
  %v99 = vsel %vm97, %v73, 0
  %v102 = vsel %vm97, %v74, 0
  %v105 = vsel %vm97, %v75, 0
  %v108 = vsel %vm97, %v76, 0
  %110 = vmatprep.subr.bf16.mxu0 0
  %111 = vmatpush1.bf16.msra.mxu0 0
  %112 = vmatprep.subr.bf16.mxu0 0
  %113 = vmatpush1.bf16.msra.mxu0 0
  %114 = vmatprep.subr.bf16.mxu0 0
  %115 = vmatpush1.bf16.msra.mxu0 0
  %116 = vmatprep.subr.bf16.mxu0 0
  %117 = vmatpush1.bf16.msra.mxu0 0
  %118 = vmatprep.subr.bf16.mxu0 0
  %119 = vmatpush1.bf16.msra.mxu0 0
  %120 = vmatprep.subr.bf16.mxu0 0
  %121 = vmatpush1.bf16.msra.mxu0 0
  %122 = vmatprep.subr.bf16.mxu0 %v92
  %123 = vmatpush1.bf16.msra.mxu0 %v91
  %124 = vmatprep.subr.bf16.mxu0 %v90
  %125 = vmatpush1.bf16.msra.mxu0 %v89
  %126 = vmatprep.subr.bf16.mxu0 0
  %127 = vmatpush2.bf16.msra.mxu0 0
  %128 = vmatprep.subr.bf16.mxu0 0
  %129 = vmatpush2.bf16.msra.mxu0 0
  %130 = vmatprep.subr.bf16.mxu0 0
  %131 = vmatpush2.bf16.msra.mxu0 0
  %132 = vmatprep.subr.bf16.mxu0 0
  %133 = vmatpush2.bf16.msra.mxu0 0
  %134 = vmatprep.subr.bf16.mxu0 0
  %135 = vmatpush2.bf16.msra.mxu0 0
  %136 = vmatprep.subr.bf16.mxu0 0
  %137 = vmatpush2.bf16.msra.mxu0 0
  %138 = vmatprep.subr.bf16.mxu0 0
  %139 = vmatpush2.bf16.msra.mxu0 0
  %140 = vmatprep.subr.bf16.mxu0 0
  %141 = vmatpush2.bf16.msra.mxu0 0
  %142 = vmatprep.mubr.bf16.mxu0 0
  %143 = vmatmul.mubr.bf16.gmra.mxu0 %v99
  %v144 = vpop.f32.mrf.mxu0
  %v145 = vadd.f32 %v50, %v144
  %v146 = vpop.f32.mrf.mxu0
  %v147 = vadd.f32 %v54, %v146
  %v148 = vpop.f32.mrf.mxu0
  %v149 = vadd.f32 %v50, %v148
  %v150 = vpop.f32.mrf.mxu0
  %v151 = vadd.f32 %v54, %v150
  %152 = vmatprep.mubr.bf16.mxu0 0
  %153 = vmatmul.mubr.bf16.gmra.mxu0 %v102
  %v154 = vpop.f32.mrf.mxu0
  %v155 = vadd.f32 %v50, %v154
  %v156 = vpop.f32.mrf.mxu0
  %v157 = vadd.f32 %v54, %v156
  %v158 = vpop.f32.mrf.mxu0
  %v159 = vadd.f32 %v50, %v158
  %v160 = vpop.f32.mrf.mxu0
  %v161 = vadd.f32 %v54, %v160
  %162 = vmatprep.mubr.bf16.mxu0 0
  %163 = vmatmul.mubr.bf16.gmra.mxu0 %v105
  %v164 = vpop.f32.mrf.mxu0
  %v165 = vadd.f32 %v50, %v164
  %v166 = vpop.f32.mrf.mxu0
  %v167 = vadd.f32 %v54, %v166
  %v168 = vpop.f32.mrf.mxu0
  %v169 = vadd.f32 %v50, %v168
  %v170 = vpop.f32.mrf.mxu0
  %v171 = vadd.f32 %v54, %v170
  %172 = vmatprep.mubr.bf16.mxu0 0
  %173 = vmatmul.mubr.bf16.gmra.mxu0 %v108
  %v174 = vpop.f32.mrf.mxu0
  %v175 = vadd.f32 %v50, %v174
  %v176 = vpop.f32.mrf.mxu0
  %v177 = vadd.f32 %v54, %v176
  %v178 = vpop.f32.mrf.mxu0
  %v179 = vadd.f32 %v50, %v178
  %v180 = vpop.f32.mrf.mxu0
  %v181 = vadd.f32 %v54, %v180
  %182 = vdwg.mxu0
  %v183 = vmax.f32 %v145, 0.0
  %v184 = vmax.f32 %v147, 0.0
  %v185 = vmax.f32 %v149, 0.0
  %v186 = vmax.f32 %v151, 0.0
  %v187 = vmax.f32 %v155, 0.0
  %v188 = vmax.f32 %v157, 0.0
  %v189 = vmax.f32 %v159, 0.0
  %v190 = vmax.f32 %v161, 0.0
  %v191 = vmax.f32 %v165, 0.0
  %v192 = vmax.f32 %v167, 0.0
  %v193 = vmax.f32 %v169, 0.0
  %v194 = vmax.f32 %v171, 0.0
  %v195 = vmax.f32 %v175, 0.0
  %v196 = vmax.f32 %v177, 0.0
  %v197 = vmax.f32 %v179, 0.0
  %v198 = vmax.f32 %v181, 0.0
  %v199 = vpack.c.bf16 %v185, %v183
  %v200 = vpack.c.bf16 %v186, %v184
  %v201 = vpack.c.bf16 %v189, %v187
  %v202 = vpack.c.bf16 %v190, %v188
  %v203 = vpack.c.bf16 %v193, %v191
  %v204 = vpack.c.bf16 %v194, %v192
  %v205 = vpack.c.bf16 %v197, %v195
  %v206 = vpack.c.bf16 %v198, %v196
  %v207 = vld [vmem:[%s4] sm:$0xf]
  %v208 = vld [vmem:[%s4 + $0x4] sm:$0xf]
  %v209 = vld [vmem:[%s4 + $0x8] sm:$0xf]
  %v210 = vld [vmem:[%s4 + $0xc] sm:$0xf]
  %v211 = vld [vmem:[%s4 + $0x10] sm:$0xf]
  %v212 = vld [vmem:[%s4 + $0x14] sm:$0xf]
  %v213 = vld [vmem:[%s4 + $0x18] sm:$0xf]
  %v214 = vld [vmem:[%s4 + $0x1c] sm:$0xf]
  %v215 = vld [vmem:[%s4 + $0x20] sm:$0xf]
  %v216 = vld [vmem:[%s4 + $0x24] sm:$0xf]
  %v217 = vld [vmem:[%s4 + $0x28] sm:$0xf]
  %v218 = vld [vmem:[%s4 + $0x2c] sm:$0xf]
  %v219 = vld [vmem:[%s4 + $0x30] sm:$0xf]
  %v220 = vld [vmem:[%s4 + $0x34] sm:$0xf]
  %v221 = vld [vmem:[%s4 + $0x38] sm:$0xf]
  %v222 = vld [vmem:[%s4 + $0x3c] sm:$0xf]
  %v223 = vld [vmem:[%s4 + $0x40] sm:$0xf]
  %v224 = vld [vmem:[%s4 + $0x44] sm:$0xf]
  %v225 = vld [vmem:[%s4 + $0x48] sm:$0xf]
  %v226 = vld [vmem:[%s4 + $0x4c] sm:$0xf]
  %v227 = vld [vmem:[%s4 + $0x50] sm:$0xf]
  %v228 = vld [vmem:[%s4 + $0x54] sm:$0xf]
  %v229 = vld [vmem:[%s4 + $0x58] sm:$0xf]
  %v230 = vld [vmem:[%s4 + $0x5c] sm:$0xf]
  %v231 = vld [vmem:[%s4 + $0x60] sm:$0xf]
  %v232 = vld [vmem:[%s4 + $0x64] sm:$0xf]
  %v233 = vld [vmem:[%s4 + $0x68] sm:$0xf]
  %v234 = vld [vmem:[%s4 + $0x6c] sm:$0xf]
  %v235 = vld [vmem:[%s4 + $0x70] sm:$0xf]
  %v236 = vld [vmem:[%s4 + $0x74] sm:$0xf]
  %v237 = vld [vmem:[%s4 + $0x78] sm:$0xf]
  %v238 = vld [vmem:[%s4 + $0x7c] sm:$0xf]
  %v239 = vld [vmem:[%s5] sm:$0x1]
  %v241 = vlaneseq
  %v242 = vshrl.u32 %v241, 7
  %v243 = vsub.s32 0, %v242
  %v244 = vrot.slane %v239, %v243
  %v278 = vunpack.c.l.b16 %v207
  %v279 = vunpack.c.l.b16 %v208
  %v280 = vunpack.c.l.b16 %v209
  %v281 = vunpack.c.l.b16 %v210
  %v282 = vunpack.c.l.b16 %v211
  %v283 = vunpack.c.l.b16 %v212
  %v284 = vunpack.c.l.b16 %v213
  %v285 = vunpack.c.l.b16 %v214
  %v286 = vunpack.c.l.b16 %v215
  %v287 = vunpack.c.l.b16 %v216
  %v288 = vunpack.c.l.b16 %v217
  %v289 = vunpack.c.l.b16 %v218
  %v290 = vunpack.c.l.b16 %v219
  %v291 = vunpack.c.l.b16 %v220
  %v292 = vunpack.c.l.b16 %v221
  %v293 = vunpack.c.l.b16 %v222
  %v294 = vunpack.c.l.b16 %v223
  %v295 = vunpack.c.l.b16 %v224
  %v296 = vunpack.c.l.b16 %v225
  %v297 = vunpack.c.l.b16 %v226
  %v298 = vunpack.c.l.b16 %v227
  %v299 = vunpack.c.l.b16 %v228
  %v300 = vunpack.c.l.b16 %v229
  %v301 = vunpack.c.l.b16 %v230
  %v302 = vunpack.c.l.b16 %v231
  %v303 = vunpack.c.l.b16 %v232
  %v304 = vunpack.c.l.b16 %v233
  %v305 = vunpack.c.l.b16 %v234
  %v306 = vunpack.c.l.b16 %v235
  %v307 = vunpack.c.l.b16 %v236
  %v308 = vunpack.c.l.b16 %v237
  %v309 = vunpack.c.l.b16 %v238
  %v310 = vpack.c.b16 %v279, %v278
  %v311 = vpack.c.b16 %v281, %v280
  %v312 = vpack.c.b16 %v283, %v282
  %v313 = vpack.c.b16 %v285, %v284
  %v314 = vpack.c.b16 %v287, %v286
  %v315 = vpack.c.b16 %v289, %v288
  %v316 = vpack.c.b16 %v291, %v290
  %v317 = vpack.c.b16 %v293, %v292
  %v318 = vpack.c.b16 %v295, %v294
  %v319 = vpack.c.b16 %v297, %v296
  %v320 = vpack.c.b16 %v299, %v298
  %v321 = vpack.c.b16 %v301, %v300
  %v322 = vpack.c.b16 %v303, %v302
  %v323 = vpack.c.b16 %v305, %v304
  %v324 = vpack.c.b16 %v307, %v306
  %v325 = vpack.c.b16 %v309, %v308
  %342 = vmatprep.subr.bf16.mxu0 0
  %343 = vmatpush1.bf16.msra.mxu0 %v317
  %344 = vmatprep.subr.bf16.mxu0 0
  %345 = vmatpush1.bf16.msra.mxu0 %v316
  %346 = vmatprep.subr.bf16.mxu0 0
  %347 = vmatpush1.bf16.msra.mxu0 %v315
  %348 = vmatprep.subr.bf16.mxu0 0
  %349 = vmatpush1.bf16.msra.mxu0 %v314
  %350 = vmatprep.subr.bf16.mxu0 0
  %351 = vmatpush1.bf16.msra.mxu0 %v313
  %352 = vmatprep.subr.bf16.mxu0 0
  %353 = vmatpush1.bf16.msra.mxu0 %v312
  %354 = vmatprep.subr.bf16.mxu0 0
  %355 = vmatpush1.bf16.msra.mxu0 %v311
  %356 = vmatprep.subr.bf16.mxu0 0
  %357 = vmatpush1.bf16.msra.mxu0 %v310
  %358 = vmatprep.subr.bf16.mxu0 0
  %359 = vmatpush2.bf16.msra.mxu0 %v325
  %360 = vmatprep.subr.bf16.mxu0 0
  %361 = vmatpush2.bf16.msra.mxu0 %v324
  %362 = vmatprep.subr.bf16.mxu0 0
  %363 = vmatpush2.bf16.msra.mxu0 %v323
  %364 = vmatprep.subr.bf16.mxu0 0
  %365 = vmatpush2.bf16.msra.mxu0 %v322
  %366 = vmatprep.subr.bf16.mxu0 0
  %367 = vmatpush2.bf16.msra.mxu0 %v321
  %368 = vmatprep.subr.bf16.mxu0 0
  %369 = vmatpush2.bf16.msra.mxu0 %v320
  %370 = vmatprep.subr.bf16.mxu0 0
  %371 = vmatpush2.bf16.msra.mxu0 %v319
  %372 = vmatprep.subr.bf16.mxu0 0
  %373 = vmatpush2.bf16.msra.mxu0 %v318
  %374 = vmatprep.mubr.bf16.mxu0 %v200
  %375 = vmatmul.mubr.bf16.gmra.mxu0 %v199
  %v376 = vpop.f32.mrf.mxu0
  %v377 = vadd.f32 %v244, %v376
  %v378 = vpop.f32.mrf.mxu0
  %v379 = vpop.f32.mrf.mxu0
  %v380 = vadd.f32 %v244, %v379
  %v381 = vpop.f32.mrf.mxu0
  %382 = vmatprep.mubr.bf16.mxu0 %v202
  %383 = vmatmul.mubr.bf16.gmra.mxu0 %v201
  %v384 = vpop.f32.mrf.mxu0
  %v385 = vadd.f32 %v244, %v384
  %v386 = vpop.f32.mrf.mxu0
  %v387 = vpop.f32.mrf.mxu0
  %v388 = vadd.f32 %v244, %v387
  %v389 = vpop.f32.mrf.mxu0
  %390 = vmatprep.mubr.bf16.mxu0 %v204
  %391 = vmatmul.mubr.bf16.gmra.mxu0 %v203
  %v392 = vpop.f32.mrf.mxu0
  %v393 = vadd.f32 %v244, %v392
  %v394 = vpop.f32.mrf.mxu0
  %v395 = vpop.f32.mrf.mxu0
  %v396 = vadd.f32 %v244, %v395
  %v397 = vpop.f32.mrf.mxu0
  %398 = vmatprep.mubr.bf16.mxu0 %v206
  %399 = vmatmul.mubr.bf16.gmra.mxu0 %v205
  %v400 = vpop.f32.mrf.mxu0
  %v401 = vadd.f32 %v244, %v400
  %v402 = vpop.f32.mrf.mxu0
  %v403 = vpop.f32.mrf.mxu0
  %v404 = vadd.f32 %v244, %v403
  %v405 = vpop.f32.mrf.mxu0
  %406 = vdwg.mxu0
  %v407 = vtanh.pop %v377
  %v408 = vtanh.pop %v380
  %v409 = vtanh.pop %v385
  %v410 = vtanh.pop %v388
  %v411 = vtanh.pop %v393
  %v412 = vtanh.pop %v396
  %v413 = vtanh.pop %v401
  %v414 = vtanh.pop %v404
  %v415 = vld [vmem:[%s6] sm:$0x1]
  %v417 = vlaneseq
  %v418 = vshrl.u32 %v417, 7
  %v419 = vsub.s32 0, %v418
  %v420 = vrot.slane %v415, %v419
  %v422 = vmul.f32 %v407, %v420
  %v423 = vmul.f32 %v408, %v420
  %v424 = vmul.f32 %v409, %v420
  %v425 = vmul.f32 %v410, %v420
  %v426 = vmul.f32 %v411, %v420
  %v427 = vmul.f32 %v412, %v420
  %v428 = vmul.f32 %v413, %v420
  %v429 = vmul.f32 %v414, %v420
  %430 = vadd.xlane.f32.xlu0 %v422
  %v431 = vpop.xlane.xlu0 %430
  %432 = vadd.xlane.f32.xlu0 %v423
  %v433 = vpop.xlane.xlu0 %432
  %434 = vadd.xlane.f32.xlu0 %v424
  %v435 = vpop.xlane.xlu0 %434
  %436 = vadd.xlane.f32.xlu0 %v425
  %v437 = vpop.xlane.xlu0 %436
  %438 = vadd.xlane.f32.xlu0 %v426
  %v439 = vpop.xlane.xlu0 %438
  %440 = vadd.xlane.f32.xlu0 %v427
  %v441 = vpop.xlane.xlu0 %440
  %442 = vadd.xlane.f32.xlu0 %v428
  %v443 = vpop.xlane.xlu0 %442
  %444 = vadd.xlane.f32.xlu0 %v429
  %v445 = vpop.xlane.xlu0 %444
  %v446 = vlaneseq
  %v447 = vshrl.u32 %v446, 7
  %v448 = vld [vmem:[%s1] sm:$0xff]
  %v449 = vcombine.high %v448, %v448
  %v451 = vunpack.c.l.s4 1966171168
  %v452 = vunpack.c.0.s8 %v451
  %v453 = vlaneseq
  %v454 = vshrl.u32 %v453, 7
  %v455 = vsub.s32 %v452, %v454
  %v456 = vrot.slane %v448, %v455
  %v458 = vunpack.c.l.s4 1966171168
  %v459 = vunpack.c.0.s8 %v458
  %v460 = vlaneseq
  %v461 = vshrl.u32 %v460, 7
  %v462 = vsub.s32 %v459, %v461
  %v463 = vrot.slane %v449, %v462
  %v464 = vcombine.high %v456, %v456
  %v465 = vcombine.high %v463, %v463
  %v467 = vunpack.c.l.s4 1966171168
  %v468 = vunpack.c.0.s8 %v467
  %v469 = vlaneseq
  %v470 = vshrl.u32 %v469, 7
  %v471 = vsub.s32 %v468, %v470
  %v472 = vrot.slane %v456, %v471
  %v474 = vunpack.c.l.s4 1966171168
  %v475 = vunpack.c.0.s8 %v474
  %v476 = vlaneseq
  %v477 = vshrl.u32 %v476, 7
  %v478 = vsub.s32 %v475, %v477
  %v479 = vrot.slane %v463, %v478
  %v481 = vunpack.c.l.s4 1966171168
  %v482 = vunpack.c.0.s8 %v481
  %v483 = vlaneseq
  %v484 = vshrl.u32 %v483, 7
  %v485 = vsub.s32 %v482, %v484
  %v486 = vrot.slane %v464, %v485
  %v488 = vunpack.c.l.s4 1966171168
  %v489 = vunpack.c.0.s8 %v488
  %v490 = vlaneseq
  %v491 = vshrl.u32 %v490, 7
  %v492 = vsub.s32 %v489, %v491
  %v493 = vrot.slane %v465, %v492
  %v494 = vcombine.high %v472, %v472
  %v495 = vcombine.high %v479, %v479
  %v496 = vcombine.high %v486, %v486
  %v497 = vcombine.high %v493, %v493
  %v498 = vlaneseq
  %v499 = vshrl.u32 %v498, 7
  %v500 = vsub.s32 0, %v499
  %v501 = vrot.slane %v472, %v500
  %v502 = vlaneseq
  %v503 = vshrl.u32 %v502, 7
  %v504 = vsub.s32 0, %v503
  %v505 = vrot.slane %v486, %v504
  %v506 = vlaneseq
  %v507 = vshrl.u32 %v506, 7
  %v508 = vsub.s32 0, %v507
  %v509 = vrot.slane %v494, %v508
  %v510 = vlaneseq
  %v511 = vshrl.u32 %v510, 7
  %v512 = vsub.s32 0, %v511
  %v513 = vrot.slane %v496, %v512
  %v514 = vlaneseq
  %v515 = vshrl.u32 %v514, 7
  %v516 = vsub.s32 0, %v515
  %v517 = vrot.slane %v479, %v516
  %v518 = vlaneseq
  %v519 = vshrl.u32 %v518, 7
  %v520 = vsub.s32 0, %v519
  %v521 = vrot.slane %v493, %v520
  %v522 = vlaneseq
  %v523 = vshrl.u32 %v522, 7
  %v524 = vsub.s32 0, %v523
  %v525 = vrot.slane %v495, %v524
  %v526 = vlaneseq
  %v527 = vshrl.u32 %v526, 7
  %v528 = vsub.s32 0, %v527
  %v529 = vrot.slane %v497, %v528
  %vm530 = vcmp.lt.s32.totalorder %v447, %v501
  %vm531 = vcmp.lt.s32.totalorder %v447, %v505
  %vm532 = vcmp.lt.s32.totalorder %v447, %v509
  %vm533 = vcmp.lt.s32.totalorder %v447, %v513
  %vm534 = vcmp.lt.s32.totalorder %v447, %v517
  %vm535 = vcmp.lt.s32.totalorder %v447, %v521
  %vm536 = vcmp.lt.s32.totalorder %v447, %v525
  %vm537 = vcmp.lt.s32.totalorder %v447, %v529
  %v538 = vsel %vm530, %v431, -1e+10
  %v539 = vsel %vm531, %v433, -1e+10
  %v540 = vsel %vm532, %v435, -1e+10
  %v541 = vsel %vm533, %v437, -1e+10
  %v542 = vsel %vm534, %v439, -1e+10
  %v543 = vsel %vm535, %v441, -1e+10
  %v544 = vsel %vm536, %v443, -1e+10
  %v545 = vsel %vm537, %v445, -1e+10
  %vm546 = vcmask 7168
  %v547 = vsel %vm546, %v538, -inf
  %v548 = vrot.slane %v547, 4
  %v549 = vmax.f32 %v547, %v548
  %v550 = vrot.slane %v549, 2
  %v551 = vmax.f32 %v549, %v550
  %v552 = vrot.slane %v551, 1
  %v553 = vmax.f32 %v551, %v552
  %v554 = vsel %vm546, %v539, -inf
  %v555 = vrot.slane %v554, 4
  %v556 = vmax.f32 %v554, %v555
  %v557 = vrot.slane %v556, 2
  %v558 = vmax.f32 %v556, %v557
  %v559 = vrot.slane %v558, 1
  %v560 = vmax.f32 %v558, %v559
  %v561 = vsel %vm546, %v540, -inf
  %v562 = vrot.slane %v561, 4
  %v563 = vmax.f32 %v561, %v562
  %v564 = vrot.slane %v563, 2
  %v565 = vmax.f32 %v563, %v564
  %v566 = vrot.slane %v565, 1
  %v567 = vmax.f32 %v565, %v566
  %v568 = vsel %vm546, %v541, -inf
  %v569 = vrot.slane %v568, 4
  %v570 = vmax.f32 %v568, %v569
  %v571 = vrot.slane %v570, 2
  %v572 = vmax.f32 %v570, %v571
  %v573 = vrot.slane %v572, 1
  %v574 = vmax.f32 %v572, %v573
  %v575 = vsel %vm546, %v542, -inf
  %v576 = vrot.slane %v575, 4
  %v577 = vmax.f32 %v575, %v576
  %v578 = vrot.slane %v577, 2
  %v579 = vmax.f32 %v577, %v578
  %v580 = vrot.slane %v579, 1
  %v581 = vmax.f32 %v579, %v580
  %v582 = vsel %vm546, %v543, -inf
  %v583 = vrot.slane %v582, 4
  %v584 = vmax.f32 %v582, %v583
  %v585 = vrot.slane %v584, 2
  %v586 = vmax.f32 %v584, %v585
  %v587 = vrot.slane %v586, 1
  %v588 = vmax.f32 %v586, %v587
  %v589 = vsel %vm546, %v544, -inf
  %v590 = vrot.slane %v589, 4
  %v591 = vmax.f32 %v589, %v590
  %v592 = vrot.slane %v591, 2
  %v593 = vmax.f32 %v591, %v592
  %v594 = vrot.slane %v593, 1
  %v595 = vmax.f32 %v593, %v594
  %v596 = vsel %vm546, %v545, -inf
  %v597 = vrot.slane %v596, 4
  %v598 = vmax.f32 %v596, %v597
  %v599 = vrot.slane %v598, 2
  %v600 = vmax.f32 %v598, %v599
  %v601 = vrot.slane %v600, 1
  %v602 = vmax.f32 %v600, %v601
  %v603 = vsub.f32 %v538, %v553
  %v604 = vsub.f32 %v539, %v560
  %v605 = vsub.f32 %v540, %v567
  %v606 = vsub.f32 %v541, %v574
  %v607 = vsub.f32 %v542, %v581
  %v608 = vsub.f32 %v543, %v588
  %v609 = vsub.f32 %v544, %v595
  %v610 = vsub.f32 %v545, %v602
  %v611 = vmul.f32 %v603, 1.442695
  %v612 = vpow.pop %v611
  %v613 = vmul.f32 %v604, 1.442695
  %v614 = vpow.pop %v613
  %v615 = vmul.f32 %v605, 1.442695
  %v616 = vpow.pop %v615
  %v617 = vmul.f32 %v606, 1.442695
  %v618 = vpow.pop %v617
  %v619 = vmul.f32 %v607, 1.442695
  %v620 = vpow.pop %v619
  %v621 = vmul.f32 %v608, 1.442695
  %v622 = vpow.pop %v621
  %v623 = vmul.f32 %v609, 1.442695
  %v624 = vpow.pop %v623
  %v625 = vmul.f32 %v610, 1.442695
  %v626 = vpow.pop %v625
  %v627 = vsel %vm546, %v612, 0.0
  %v628 = vrot.slane %v627, 4
  %v629 = vadd.f32 %v627, %v628
  %v630 = vrot.slane %v629, 2
  %v631 = vadd.f32 %v629, %v630
  %v632 = vrot.slane %v631, 1
  %v633 = vadd.f32 %v631, %v632
  %v634 = vsel %vm546, %v614, 0.0
  %v635 = vrot.slane %v634, 4
  %v636 = vadd.f32 %v634, %v635
  %v637 = vrot.slane %v636, 2
  %v638 = vadd.f32 %v636, %v637
  %v639 = vrot.slane %v638, 1
  %v640 = vadd.f32 %v638, %v639
  %v641 = vsel %vm546, %v616, 0.0
  %v642 = vrot.slane %v641, 4
  %v643 = vadd.f32 %v641, %v642
  %v644 = vrot.slane %v643, 2
  %v645 = vadd.f32 %v643, %v644
  %v646 = vrot.slane %v645, 1
  %v647 = vadd.f32 %v645, %v646
  %v648 = vsel %vm546, %v618, 0.0
  %v649 = vrot.slane %v648, 4
  %v650 = vadd.f32 %v648, %v649
  %v651 = vrot.slane %v650, 2
  %v652 = vadd.f32 %v650, %v651
  %v653 = vrot.slane %v652, 1
  %v654 = vadd.f32 %v652, %v653
  %v655 = vsel %vm546, %v620, 0.0
  %v656 = vrot.slane %v655, 4
  %v657 = vadd.f32 %v655, %v656
  %v658 = vrot.slane %v657, 2
  %v659 = vadd.f32 %v657, %v658
  %v660 = vrot.slane %v659, 1
  %v661 = vadd.f32 %v659, %v660
  %v662 = vsel %vm546, %v622, 0.0
  %v663 = vrot.slane %v662, 4
  %v664 = vadd.f32 %v662, %v663
  %v665 = vrot.slane %v664, 2
  %v666 = vadd.f32 %v664, %v665
  %v667 = vrot.slane %v666, 1
  %v668 = vadd.f32 %v666, %v667
  %v669 = vsel %vm546, %v624, 0.0
  %v670 = vrot.slane %v669, 4
  %v671 = vadd.f32 %v669, %v670
  %v672 = vrot.slane %v671, 2
  %v673 = vadd.f32 %v671, %v672
  %v674 = vrot.slane %v673, 1
  %v675 = vadd.f32 %v673, %v674
  %v676 = vsel %vm546, %v626, 0.0
  %v677 = vrot.slane %v676, 4
  %v678 = vadd.f32 %v676, %v677
  %v679 = vrot.slane %v678, 2
  %v680 = vadd.f32 %v678, %v679
  %v681 = vrot.slane %v680, 1
  %v682 = vadd.f32 %v680, %v681
  %v683 = vrcp.pop %v633
  %v684 = vrcp.pop %v640
  %v685 = vrcp.pop %v647
  %v686 = vrcp.pop %v654
  %v687 = vrcp.pop %v661
  %v688 = vrcp.pop %v668
  %v689 = vrcp.pop %v675
  %v690 = vrcp.pop %v682
  %v691 = vmul.f32 %v612, %v683
  %v692 = vmul.f32 %v614, %v684
  %v693 = vmul.f32 %v616, %v685
  %v694 = vmul.f32 %v618, %v686
  %v695 = vmul.f32 %v620, %v687
  %v696 = vmul.f32 %v622, %v688
  %v697 = vmul.f32 %v624, %v689
  %v698 = vmul.f32 %v626, %v690
  %700 = vset.pattern.permute.xlu0 0
  %701 = vperm.xlu0 %700, %v691
  %v702 = vpop.permute.xlu0 %701
  %705 = vset.pattern.permute.xlu0 0
  %706 = vperm.xlu0 %705, %v692
  %v707 = vpop.permute.xlu0 %706
  %710 = vset.pattern.permute.xlu0 0
  %711 = vperm.xlu0 %710, %v693
  %v712 = vpop.permute.xlu0 %711
  %715 = vset.pattern.permute.xlu0 0
  %716 = vperm.xlu0 %715, %v694
  %v717 = vpop.permute.xlu0 %716
  %720 = vset.pattern.permute.xlu0 0
  %721 = vperm.xlu0 %720, %v695
  %v722 = vpop.permute.xlu0 %721
  %725 = vset.pattern.permute.xlu0 0
  %726 = vperm.xlu0 %725, %v696
  %v727 = vpop.permute.xlu0 %726
  %730 = vset.pattern.permute.xlu0 0
  %731 = vperm.xlu0 %730, %v697
  %v732 = vpop.permute.xlu0 %731
  %735 = vset.pattern.permute.xlu0 0
  %736 = vperm.xlu0 %735, %v698
  %v737 = vpop.permute.xlu0 %736
  %v739 = vmul.f32 %v702, %v183
  %v740 = vmul.f32 %v702, %v184
  %v741 = vmul.f32 %v707, %v185
  %v742 = vmul.f32 %v707, %v186
  %v743 = vmul.f32 %v712, %v187
  %v744 = vmul.f32 %v712, %v188
  %v745 = vmul.f32 %v717, %v189
  %v746 = vmul.f32 %v717, %v190
  %v747 = vmul.f32 %v722, %v191
  %v748 = vmul.f32 %v722, %v192
  %v749 = vmul.f32 %v727, %v193
  %v750 = vmul.f32 %v727, %v194
  %v751 = vmul.f32 %v732, %v195
  %v752 = vmul.f32 %v732, %v196
  %v753 = vmul.f32 %v737, %v197
  %v754 = vmul.f32 %v737, %v198
  %v755 = vrot.slane %v739, 4
  %v756 = vadd.f32 %v739, %v755
  %v757 = vrot.slane %v756, 2
  %v758 = vadd.f32 %v756, %v757
  %v759 = vrot.slane %v758, 1
  %v760 = vadd.f32 %v758, %v759
  %v761 = vrot.slane %v740, 4
  %v762 = vadd.f32 %v740, %v761
  %v763 = vrot.slane %v762, 2
  %v764 = vadd.f32 %v762, %v763
  %v765 = vrot.slane %v764, 1
  %v766 = vadd.f32 %v764, %v765
  %v767 = vrot.slane %v741, 4
  %v768 = vadd.f32 %v741, %v767
  %v769 = vrot.slane %v768, 2
  %v770 = vadd.f32 %v768, %v769
  %v771 = vrot.slane %v770, 1
  %v772 = vadd.f32 %v770, %v771
  %v773 = vrot.slane %v742, 4
  %v774 = vadd.f32 %v742, %v773
  %v775 = vrot.slane %v774, 2
  %v776 = vadd.f32 %v774, %v775
  %v777 = vrot.slane %v776, 1
  %v778 = vadd.f32 %v776, %v777
  %v779 = vrot.slane %v743, 4
  %v780 = vadd.f32 %v743, %v779
  %v781 = vrot.slane %v780, 2
  %v782 = vadd.f32 %v780, %v781
  %v783 = vrot.slane %v782, 1
  %v784 = vadd.f32 %v782, %v783
  %v785 = vrot.slane %v744, 4
  %v786 = vadd.f32 %v744, %v785
  %v787 = vrot.slane %v786, 2
  %v788 = vadd.f32 %v786, %v787
  %v789 = vrot.slane %v788, 1
  %v790 = vadd.f32 %v788, %v789
  %v791 = vrot.slane %v745, 4
  %v792 = vadd.f32 %v745, %v791
  %v793 = vrot.slane %v792, 2
  %v794 = vadd.f32 %v792, %v793
  %v795 = vrot.slane %v794, 1
  %v796 = vadd.f32 %v794, %v795
  %v797 = vrot.slane %v746, 4
  %v798 = vadd.f32 %v746, %v797
  %v799 = vrot.slane %v798, 2
  %v800 = vadd.f32 %v798, %v799
  %v801 = vrot.slane %v800, 1
  %v802 = vadd.f32 %v800, %v801
  %v803 = vrot.slane %v747, 4
  %v804 = vadd.f32 %v747, %v803
  %v805 = vrot.slane %v804, 2
  %v806 = vadd.f32 %v804, %v805
  %v807 = vrot.slane %v806, 1
  %v808 = vadd.f32 %v806, %v807
  %v809 = vrot.slane %v748, 4
  %v810 = vadd.f32 %v748, %v809
  %v811 = vrot.slane %v810, 2
  %v812 = vadd.f32 %v810, %v811
  %v813 = vrot.slane %v812, 1
  %v814 = vadd.f32 %v812, %v813
  %v815 = vrot.slane %v749, 4
  %v816 = vadd.f32 %v749, %v815
  %v817 = vrot.slane %v816, 2
  %v818 = vadd.f32 %v816, %v817
  %v819 = vrot.slane %v818, 1
  %v820 = vadd.f32 %v818, %v819
  %v821 = vrot.slane %v750, 4
  %v822 = vadd.f32 %v750, %v821
  %v823 = vrot.slane %v822, 2
  %v824 = vadd.f32 %v822, %v823
  %v825 = vrot.slane %v824, 1
  %v826 = vadd.f32 %v824, %v825
  %v827 = vrot.slane %v751, 4
  %v828 = vadd.f32 %v751, %v827
  %v829 = vrot.slane %v828, 2
  %v830 = vadd.f32 %v828, %v829
  %v831 = vrot.slane %v830, 1
  %v832 = vadd.f32 %v830, %v831
  %v833 = vrot.slane %v752, 4
  %v834 = vadd.f32 %v752, %v833
  %v835 = vrot.slane %v834, 2
  %v836 = vadd.f32 %v834, %v835
  %v837 = vrot.slane %v836, 1
  %v838 = vadd.f32 %v836, %v837
  %v839 = vrot.slane %v753, 4
  %v840 = vadd.f32 %v753, %v839
  %v841 = vrot.slane %v840, 2
  %v842 = vadd.f32 %v840, %v841
  %v843 = vrot.slane %v842, 1
  %v844 = vadd.f32 %v842, %v843
  %v845 = vrot.slane %v754, 4
  %v846 = vadd.f32 %v754, %v845
  %v847 = vrot.slane %v846, 2
  %v848 = vadd.f32 %v846, %v847
  %v849 = vrot.slane %v848, 1
  %v850 = vadd.f32 %v848, %v849
  %v851 = vpack.c.bf16 %v760, %v760
  %v852 = vpack.c.bf16 %v766, %v766
  %v853 = vpack.c.bf16 %v772, %v772
  %v854 = vpack.c.bf16 %v778, %v778
  %v855 = vpack.c.bf16 %v784, %v784
  %v856 = vpack.c.bf16 %v790, %v790
  %v857 = vpack.c.bf16 %v796, %v796
  %v858 = vpack.c.bf16 %v802, %v802
  %v859 = vpack.c.bf16 %v808, %v808
  %v860 = vpack.c.bf16 %v814, %v814
  %v861 = vpack.c.bf16 %v820, %v820
  %v862 = vpack.c.bf16 %v826, %v826
  %v863 = vpack.c.bf16 %v832, %v832
  %v864 = vpack.c.bf16 %v838, %v838
  %v865 = vpack.c.bf16 %v844, %v844
  %v866 = vpack.c.bf16 %v850, %v850
  %v867 = vld [vmem:[%s7] sm:$0xf]
  %v868 = vld [vmem:[%s7 + $0x4] sm:$0xf]
  %v869 = vld [vmem:[%s7 + $0x8] sm:$0xf]
  %v870 = vld [vmem:[%s7 + $0xc] sm:$0xf]
  %v871 = vld [vmem:[%s7 + $0x10] sm:$0xf]
  %v872 = vld [vmem:[%s7 + $0x14] sm:$0xf]
  %v873 = vld [vmem:[%s7 + $0x18] sm:$0xf]
  %v874 = vld [vmem:[%s7 + $0x1c] sm:$0xf]
  %v875 = vld [vmem:[%s7 + $0x20] sm:$0xf]
  %v876 = vld [vmem:[%s7 + $0x24] sm:$0xf]
  %v877 = vld [vmem:[%s7 + $0x28] sm:$0xf]
  %v878 = vld [vmem:[%s7 + $0x2c] sm:$0xf]
  %v879 = vld [vmem:[%s7 + $0x30] sm:$0xf]
  %v880 = vld [vmem:[%s7 + $0x34] sm:$0xf]
  %v881 = vld [vmem:[%s7 + $0x38] sm:$0xf]
  %v882 = vld [vmem:[%s7 + $0x3c] sm:$0xf]
  %v883 = vld [vmem:[%s7 + $0x40] sm:$0xf]
  %v884 = vld [vmem:[%s7 + $0x44] sm:$0xf]
  %v885 = vld [vmem:[%s7 + $0x48] sm:$0xf]
  %v886 = vld [vmem:[%s7 + $0x4c] sm:$0xf]
  %v887 = vld [vmem:[%s7 + $0x50] sm:$0xf]
  %v888 = vld [vmem:[%s7 + $0x54] sm:$0xf]
  %v889 = vld [vmem:[%s7 + $0x58] sm:$0xf]
  %v890 = vld [vmem:[%s7 + $0x5c] sm:$0xf]
  %v891 = vld [vmem:[%s7 + $0x60] sm:$0xf]
  %v892 = vld [vmem:[%s7 + $0x64] sm:$0xf]
  %v893 = vld [vmem:[%s7 + $0x68] sm:$0xf]
  %v894 = vld [vmem:[%s7 + $0x6c] sm:$0xf]
  %v895 = vld [vmem:[%s7 + $0x70] sm:$0xf]
  %v896 = vld [vmem:[%s7 + $0x74] sm:$0xf]
  %v897 = vld [vmem:[%s7 + $0x78] sm:$0xf]
  %v898 = vld [vmem:[%s7 + $0x7c] sm:$0xf]
  %v899 = vld [vmem:[%s8] sm:$0x1]
  %v901 = vlaneseq
  %v902 = vshrl.u32 %v901, 7
  %v903 = vsub.s32 0, %v902
  %v904 = vrot.slane %v899, %v903
  %v922 = vunpack.c.l.b16 %v851
  %v923 = vunpack.c.l.b16 %v852
  %v924 = vunpack.c.l.b16 %v853
  %v925 = vunpack.c.l.b16 %v854
  %v926 = vunpack.c.l.b16 %v855
  %v927 = vunpack.c.l.b16 %v856
  %v928 = vunpack.c.l.b16 %v857
  %v929 = vunpack.c.l.b16 %v858
  %v930 = vunpack.c.l.b16 %v859
  %v931 = vunpack.c.l.b16 %v860
  %v932 = vunpack.c.l.b16 %v861
  %v933 = vunpack.c.l.b16 %v862
  %v934 = vunpack.c.l.b16 %v863
  %v935 = vunpack.c.l.b16 %v864
  %v936 = vunpack.c.l.b16 %v865
  %v937 = vunpack.c.l.b16 %v866
  %vm938 = vcmask 1041409
  %v939 = vsel %vm938, %v924, %v922
  %vm940 = vcmask 1042434
  %v941 = vsel %vm940, %v926, %v939
  %vm942 = vcmask 1043459
  %v943 = vsel %vm942, %v928, %v941
  %vm944 = vcmask 1044484
  %v945 = vsel %vm944, %v930, %v943
  %vm946 = vcmask 1045509
  %v947 = vsel %vm946, %v932, %v945
  %vm948 = vcmask 1046534
  %v949 = vsel %vm948, %v934, %v947
  %vm950 = vcmask 1047559
  %v951 = vsel %vm950, %v936, %v949
  %v952 = vsel %vm938, %v925, %v923
  %v953 = vsel %vm940, %v927, %v952
  %v954 = vsel %vm942, %v929, %v953
  %v955 = vsel %vm944, %v931, %v954
  %v956 = vsel %vm946, %v933, %v955
  %v957 = vsel %vm948, %v935, %v956
  %v958 = vsel %vm950, %v937, %v957
  %v959 = vpack.c.b16 %v951, %v951
  %v960 = vpack.c.b16 %v958, %v958
  %v995 = vunpack.c.l.b16 %v867
  %v996 = vunpack.c.l.b16 %v868
  %v997 = vunpack.c.l.b16 %v869
  %v998 = vunpack.c.l.b16 %v870
  %v999 = vunpack.c.l.b16 %v871
  %v1000 = vunpack.c.l.b16 %v872
  %v1001 = vunpack.c.l.b16 %v873
  %v1002 = vunpack.c.l.b16 %v874
  %v1003 = vunpack.c.l.b16 %v875
  %v1004 = vunpack.c.l.b16 %v876
  %v1005 = vunpack.c.l.b16 %v877
  %v1006 = vunpack.c.l.b16 %v878
  %v1007 = vunpack.c.l.b16 %v879
  %v1008 = vunpack.c.l.b16 %v880
  %v1009 = vunpack.c.l.b16 %v881
  %v1010 = vunpack.c.l.b16 %v882
  %v1011 = vunpack.c.l.b16 %v883
  %v1012 = vunpack.c.l.b16 %v884
  %v1013 = vunpack.c.l.b16 %v885
  %v1014 = vunpack.c.l.b16 %v886
  %v1015 = vunpack.c.l.b16 %v887
  %v1016 = vunpack.c.l.b16 %v888
  %v1017 = vunpack.c.l.b16 %v889
  %v1018 = vunpack.c.l.b16 %v890
  %v1019 = vunpack.c.l.b16 %v891
  %v1020 = vunpack.c.l.b16 %v892
  %v1021 = vunpack.c.l.b16 %v893
  %v1022 = vunpack.c.l.b16 %v894
  %v1023 = vunpack.c.l.b16 %v895
  %v1024 = vunpack.c.l.b16 %v896
  %v1025 = vunpack.c.l.b16 %v897
  %v1026 = vunpack.c.l.b16 %v898
  %v1027 = vpack.c.b16 %v996, %v995
  %v1028 = vpack.c.b16 %v998, %v997
  %v1029 = vpack.c.b16 %v1000, %v999
  %v1030 = vpack.c.b16 %v1002, %v1001
  %v1031 = vpack.c.b16 %v1004, %v1003
  %v1032 = vpack.c.b16 %v1006, %v1005
  %v1033 = vpack.c.b16 %v1008, %v1007
  %v1034 = vpack.c.b16 %v1010, %v1009
  %v1035 = vpack.c.b16 %v1012, %v1011
  %v1036 = vpack.c.b16 %v1014, %v1013
  %v1037 = vpack.c.b16 %v1016, %v1015
  %v1038 = vpack.c.b16 %v1018, %v1017
  %v1039 = vpack.c.b16 %v1020, %v1019
  %v1040 = vpack.c.b16 %v1022, %v1021
  %v1041 = vpack.c.b16 %v1024, %v1023
  %v1042 = vpack.c.b16 %v1026, %v1025
  %1059 = vmatprep.subr.bf16.mxu0 0
  %1060 = vmatpush1.bf16.msra.mxu0 %v1034
  %1061 = vmatprep.subr.bf16.mxu0 0
  %1062 = vmatpush1.bf16.msra.mxu0 %v1033
  %1063 = vmatprep.subr.bf16.mxu0 0
  %1064 = vmatpush1.bf16.msra.mxu0 %v1032
  %1065 = vmatprep.subr.bf16.mxu0 0
  %1066 = vmatpush1.bf16.msra.mxu0 %v1031
  %1067 = vmatprep.subr.bf16.mxu0 0
  %1068 = vmatpush1.bf16.msra.mxu0 %v1030
  %1069 = vmatprep.subr.bf16.mxu0 0
  %1070 = vmatpush1.bf16.msra.mxu0 %v1029
  %1071 = vmatprep.subr.bf16.mxu0 0
  %1072 = vmatpush1.bf16.msra.mxu0 %v1028
  %1073 = vmatprep.subr.bf16.mxu0 0
  %1074 = vmatpush1.bf16.msra.mxu0 %v1027
  %1075 = vmatprep.subr.bf16.mxu0 0
  %1076 = vmatpush2.bf16.msra.mxu0 %v1042
  %1077 = vmatprep.subr.bf16.mxu0 0
  %1078 = vmatpush2.bf16.msra.mxu0 %v1041
  %1079 = vmatprep.subr.bf16.mxu0 0
  %1080 = vmatpush2.bf16.msra.mxu0 %v1040
  %1081 = vmatprep.subr.bf16.mxu0 0
  %1082 = vmatpush2.bf16.msra.mxu0 %v1039
  %1083 = vmatprep.subr.bf16.mxu0 0
  %1084 = vmatpush2.bf16.msra.mxu0 %v1038
  %1085 = vmatprep.subr.bf16.mxu0 0
  %1086 = vmatpush2.bf16.msra.mxu0 %v1037
  %1087 = vmatprep.subr.bf16.mxu0 0
  %1088 = vmatpush2.bf16.msra.mxu0 %v1036
  %1089 = vmatprep.subr.bf16.mxu0 0
  %1090 = vmatpush2.bf16.msra.mxu0 %v1035
  %1091 = vmatprep.mubr.bf16.mxu0 %v960
  %1092 = vmatmul.mubr.bf16.gmra.mxu0 %v959
  %v1093 = vpop.f32.mrf.mxu0
  %v1094 = vadd.f32 %v904, %v1093
  %v1095 = vpop.f32.mrf.mxu0
  %v1096 = vpop.f32.mrf.mxu0
  %v1097 = vpop.f32.mrf.mxu0
  %1098 = vdwg.mxu0
  %v1099 = vsub.f32 0.0, %v1094
  %v1100 = vmul.f32 %v1099, 1.442695
  %v1101 = vpow.pop %v1100
  %v1102 = vadd.f32 %v1101, 1.0
  %v1103 = vrcp.pop %v1102
  %v1104 = vmul.f32 1.0, %v1103
  %vm1105 = vcmask 31744
  %1106 = vst.msk [vmem:[%s9] sm:$0xff] %vm1105, %v1104
  // Predicated region
  $region38: #{tpu_custom_call.1} parent=0 // pred_check
    _
  $region39: #{tpu_custom_call.1} parent=0 // pred_check_branch
    %1108 = sbr.rel (0) target = $region41
  $region40: #{tpu_custom_call.1} parent=0 // pred_region
    _
  $region41: #{tpu_custom_call.1} parent=0 // pred_fallthru
    _
  // Predicated region
  $region42: #{tpu_custom_call.1} parent=0 // pred_check
    _
  $region43: #{tpu_custom_call.1} parent=0 // pred_check_branch
    %1110 = sbr.rel (0) target = $region45
  $region44: #{tpu_custom_call.1} parent=0 // pred_region
    _
  $region45: #{tpu_custom_call.1} parent=0 // pred_fallthru
    _

// kernel: tpu_custom_call.1
$region0: #{tpu_custom_call.1}
  #allocation0 [shape = 'u32[]', space=smem, size = 0x4, offset = 0x4, fixed_abs, tag = 'smem constant byte address 0x4 - core index']
  #allocation1 [shape = 'u32[144,128]{1,0:T(1,128)}', space=vmem, size = 0x12000, scoped, tag = 'internal scratch']
  %s0 = inlined_call_operand.vmem [shape: bf16[64,32], index: 0, kind: input, shape index: {}]
  %s1 = inlined_call_operand.vmem [shape: s32[8,1], index: 1, kind: input, shape index: {}]
  %s2 = inlined_call_operand.vmem [shape: bf16[32,256], index: 2, kind: input, shape index: {}]
  %s3 = inlined_call_operand.vmem [shape: f32[1,256], index: 3, kind: input, shape index: {}]
  %s4 = inlined_call_operand.vmem [shape: bf16[256,128], index: 4, kind: input, shape index: {}]
  %s5 = inlined_call_operand.vmem [shape: f32[1,128], index: 5, kind: input, shape index: {}]
  %s6 = inlined_call_operand.vmem [shape: f32[1,128], index: 6, kind: input, shape index: {}]
  %s7 = inlined_call_operand.vmem [shape: bf16[256,4], index: 7, kind: input, shape index: {}]
  %s8 = inlined_call_operand.vmem [shape: f32[1,4], index: 8, kind: input, shape index: {}]
  %s9 = inlined_call_operand.vmem [shape: f32[8,4], index: 9, kind: output, shape index: {}]
  %s10 = sld [smem:[#allocation0]]
  $region46: #{tpu_custom_call.1} parent=0
    _
  %s12 = ssub.s32 1, %s10
  %s13 = scalar_select 0, %s12, %s10
  // Predicated region
  $region2: #{tpu_custom_call.1} parent=0 // pred_check
    _
  $region3: #{tpu_custom_call.1} parent=0 // pred_check_branch
    %15 = sbr.rel (0) target = $region5
  $region4: #{tpu_custom_call.1} parent=0 // pred_region
    _
  $region5: #{tpu_custom_call.1} parent=0 // pred_fallthru
    _
  // Predicated region
  $region6: #{tpu_custom_call.1} parent=0 // pred_check
    _
  $region7: #{tpu_custom_call.1} parent=0 // pred_check_branch
    %17 = sbr.rel (0) target = $region9
  $region8: #{tpu_custom_call.1} parent=0 // pred_region
    _
  $region9: #{tpu_custom_call.1} parent=0 // pred_fallthru
    _
  // Predicated region
  $region10: #{tpu_custom_call.1} parent=0 // pred_check
    _
  $region11: #{tpu_custom_call.1} parent=0 // pred_check_branch
    %19 = sbr.rel (0) target = $region13
  $region12: #{tpu_custom_call.1} parent=0 // pred_region
    _
  $region13: #{tpu_custom_call.1} parent=0 // pred_fallthru
    _
  // Predicated region
  $region14: #{tpu_custom_call.1} parent=0 // pred_check
    _
  $region15: #{tpu_custom_call.1} parent=0 // pred_check_branch
    %21 = sbr.rel (0) target = $region17
  $region16: #{tpu_custom_call.1} parent=0 // pred_region
    _
  $region17: #{tpu_custom_call.1} parent=0 // pred_fallthru
    _
  // Predicated region
  $region18: #{tpu_custom_call.1} parent=0 // pred_check
    _
  $region19: #{tpu_custom_call.1} parent=0 // pred_check_branch
    %23 = sbr.rel (0) target = $region21
  $region20: #{tpu_custom_call.1} parent=0 // pred_region
    _
  $region21: #{tpu_custom_call.1} parent=0 // pred_fallthru
    _
  // Predicated region
  $region22: #{tpu_custom_call.1} parent=0 // pred_check
    _
  $region23: #{tpu_custom_call.1} parent=0 // pred_check_branch
    %25 = sbr.rel (0) target = $region25
  $region24: #{tpu_custom_call.1} parent=0 // pred_region
    _
  $region25: #{tpu_custom_call.1} parent=0 // pred_fallthru
    _
  // Predicated region
  $region26: #{tpu_custom_call.1} parent=0 // pred_check
    _
  $region27: #{tpu_custom_call.1} parent=0 // pred_check_branch
    %27 = sbr.rel (0) target = $region29
  $region28: #{tpu_custom_call.1} parent=0 // pred_region
    _
  $region29: #{tpu_custom_call.1} parent=0 // pred_fallthru
    _
  // Predicated region
  $region30: #{tpu_custom_call.1} parent=0 // pred_check
    _
  $region31: #{tpu_custom_call.1} parent=0 // pred_check_branch
    %29 = sbr.rel (0) target = $region33
  $region32: #{tpu_custom_call.1} parent=0 // pred_region
    _
  $region33: #{tpu_custom_call.1} parent=0 // pred_fallthru
    _
  // Predicated region
  $region34: #{tpu_custom_call.1} parent=0 // pred_check
    _
  $region35: #{tpu_custom_call.1} parent=0 // pred_check_branch
    %31 = sbr.rel (0) target = $region37
  $region36: #{tpu_custom_call.1} parent=0 // pred_region
    _
  $region37: #{tpu_custom_call.1} parent=0 // pred_fallthru
    _
  %v33 = vld [vmem:[%s0] sm:$0xf]
  %v34 = vld [vmem:[%s0 + $0x4] sm:$0xf]
  %v35 = vld [vmem:[%s0 + $0x8] sm:$0xf]
  %v36 = vld [vmem:[%s0 + $0xc] sm:$0xf]
  %v37 = vld [vmem:[%s0 + $0x10] sm:$0xf]
  %v38 = vld [vmem:[%s0 + $0x14] sm:$0xf]
  %v39 = vld [vmem:[%s0 + $0x18] sm:$0xf]
  %v40 = vld [vmem:[%s0 + $0x1c] sm:$0xf]
  %v41 = vld [vmem:[%s2] sm:$0xff]
  %v42 = vld [vmem:[%s2 + $0x8] sm:$0xff]
  %v43 = vld [vmem:[%s2 + $0x10] sm:$0xff]
  %v44 = vld [vmem:[%s2 + $0x18] sm:$0xff]
  %v45 = vld [vmem:[%s3] sm:$0x3]
  %v47 = vlaneseq
  %v48 = vshrl.u32 %v47, 7
  %v49 = vsub.s32 0, %v48
  %v50 = vrot.slane %v45, %v49
  %v51 = vlaneseq
  %v52 = vshrl.u32 %v51, 7
  %v53 = vsub.s32 1, %v52
  %v54 = vrot.slane %v45, %v53
  %v65 = vunpack.c.l.b16 %v33
  %v66 = vunpack.c.l.b16 %v34
  %v67 = vunpack.c.l.b16 %v35
  %v68 = vunpack.c.l.b16 %v36
  %v69 = vunpack.c.l.b16 %v37
  %v70 = vunpack.c.l.b16 %v38
  %v71 = vunpack.c.l.b16 %v39
  %v72 = vunpack.c.l.b16 %v40
  %v73 = vpack.c.b16 %v66, %v65
  %v74 = vpack.c.b16 %v68, %v67
  %v75 = vpack.c.b16 %v70, %v69
  %v76 = vpack.c.b16 %v72, %v71
  %v81 = vunpack.c.l.b16 %v41
  %v82 = vunpack.c.h.b16 %v41
  %v83 = vunpack.c.l.b16 %v42
  %v84 = vunpack.c.h.b16 %v42
  %v85 = vunpack.c.l.b16 %v43
  %v86 = vunpack.c.h.b16 %v43
  %v87 = vunpack.c.l.b16 %v44
  %v88 = vunpack.c.h.b16 %v44
  %v89 = vpack.c.b16 %v83, %v81
  %v90 = vpack.c.b16 %v84, %v82
  %v91 = vpack.c.b16 %v87, %v85
  %v92 = vpack.c.b16 %v88, %v86
  %vm97 = vcmask 261120
  %v99 = vsel %vm97, %v73, 0
  %v102 = vsel %vm97, %v74, 0
  %v105 = vsel %vm97, %v75, 0
  %v108 = vsel %vm97, %v76, 0
  %110 = vmatprep.subr.bf16.mxu0 0
  %111 = vmatpush1.bf16.msra.mxu0 0
  %112 = vmatprep.subr.bf16.mxu0 0
  %113 = vmatpush1.bf16.msra.mxu0 0
  %114 = vmatprep.subr.bf16.mxu0 0
  %115 = vmatpush1.bf16.msra.mxu0 0
  %116 = vmatprep.subr.bf16.mxu0 0
  %117 = vmatpush1.bf16.msra.mxu0 0
  %118 = vmatprep.subr.bf16.mxu0 0
  %119 = vmatpush1.bf16.msra.mxu0 0
  %120 = vmatprep.subr.bf16.mxu0 0
  %121 = vmatpush1.bf16.msra.mxu0 0
  %122 = vmatprep.subr.bf16.mxu0 %v92
  %123 = vmatpush1.bf16.msra.mxu0 %v91
  %124 = vmatprep.subr.bf16.mxu0 %v90
  %125 = vmatpush1.bf16.msra.mxu0 %v89
  %126 = vmatprep.subr.bf16.mxu0 0
  %127 = vmatpush2.bf16.msra.mxu0 0
  %128 = vmatprep.subr.bf16.mxu0 0
  %129 = vmatpush2.bf16.msra.mxu0 0
  %130 = vmatprep.subr.bf16.mxu0 0
  %131 = vmatpush2.bf16.msra.mxu0 0
  %132 = vmatprep.subr.bf16.mxu0 0
  %133 = vmatpush2.bf16.msra.mxu0 0
  %134 = vmatprep.subr.bf16.mxu0 0
  %135 = vmatpush2.bf16.msra.mxu0 0
  %136 = vmatprep.subr.bf16.mxu0 0
  %137 = vmatpush2.bf16.msra.mxu0 0
  %138 = vmatprep.subr.bf16.mxu0 0
  %139 = vmatpush2.bf16.msra.mxu0 0
  %140 = vmatprep.subr.bf16.mxu0 0
  %141 = vmatpush2.bf16.msra.mxu0 0
  %142 = vmatprep.mubr.bf16.mxu0 0
  %143 = vmatmul.mubr.bf16.gmra.mxu0 %v99
  %v144 = vpop.f32.mrf.mxu0
  %v145 = vadd.f32 %v50, %v144
  %v146 = vpop.f32.mrf.mxu0
  %v147 = vadd.f32 %v54, %v146
  %v148 = vpop.f32.mrf.mxu0
  %v149 = vadd.f32 %v50, %v148
  %v150 = vpop.f32.mrf.mxu0
  %v151 = vadd.f32 %v54, %v150
  %152 = vmatprep.mubr.bf16.mxu0 0
  %153 = vmatmul.mubr.bf16.gmra.mxu0 %v102
  %v154 = vpop.f32.mrf.mxu0
  %v155 = vadd.f32 %v50, %v154
  %v156 = vpop.f32.mrf.mxu0
  %v157 = vadd.f32 %v54, %v156
  %v158 = vpop.f32.mrf.mxu0
  %v159 = vadd.f32 %v50, %v158
  %v160 = vpop.f32.mrf.mxu0
  %v161 = vadd.f32 %v54, %v160
  %162 = vmatprep.mubr.bf16.mxu0 0
  %163 = vmatmul.mubr.bf16.gmra.mxu0 %v105
  %v164 = vpop.f32.mrf.mxu0
  %v165 = vadd.f32 %v50, %v164
  %v166 = vpop.f32.mrf.mxu0
  %v167 = vadd.f32 %v54, %v166
  %v168 = vpop.f32.mrf.mxu0
  %v169 = vadd.f32 %v50, %v168
  %v170 = vpop.f32.mrf.mxu0
  %v171 = vadd.f32 %v54, %v170
  %172 = vmatprep.mubr.bf16.mxu0 0
  %173 = vmatmul.mubr.bf16.gmra.mxu0 %v108
  %v174 = vpop.f32.mrf.mxu0
  %v175 = vadd.f32 %v50, %v174
  %v176 = vpop.f32.mrf.mxu0
  %v177 = vadd.f32 %v54, %v176
  %v178 = vpop.f32.mrf.mxu0
  %v179 = vadd.f32 %v50, %v178
  %v180 = vpop.f32.mrf.mxu0
  %v181 = vadd.f32 %v54, %v180
  %182 = vdwg.mxu0
  %v183 = vmax.f32 %v145, 0.0
  %v184 = vmax.f32 %v147, 0.0
  %v185 = vmax.f32 %v149, 0.0
  %v186 = vmax.f32 %v151, 0.0
  %v187 = vmax.f32 %v155, 0.0
  %v188 = vmax.f32 %v157, 0.0
  %v189 = vmax.f32 %v159, 0.0
  %v190 = vmax.f32 %v161, 0.0
  %v191 = vmax.f32 %v165, 0.0
  %v192 = vmax.f32 %v167, 0.0
  %v193 = vmax.f32 %v169, 0.0
  %v194 = vmax.f32 %v171, 0.0
  %v195 = vmax.f32 %v175, 0.0
  %v196 = vmax.f32 %v177, 0.0
  %v197 = vmax.f32 %v179, 0.0
  %v198 = vmax.f32 %v181, 0.0
  %v199 = vpack.c.bf16 %v185, %v183
  %v200 = vpack.c.bf16 %v186, %v184
  %v201 = vpack.c.bf16 %v189, %v187
  %v202 = vpack.c.bf16 %v190, %v188
  %v203 = vpack.c.bf16 %v193, %v191
  %v204 = vpack.c.bf16 %v194, %v192
  %v205 = vpack.c.bf16 %v197, %v195
  %v206 = vpack.c.bf16 %v198, %v196
  %v207 = vld [vmem:[%s4] sm:$0xf]
  %v208 = vld [vmem:[%s4 + $0x4] sm:$0xf]
  %v209 = vld [vmem:[%s4 + $0x8] sm:$0xf]
  %v210 = vld [vmem:[%s4 + $0xc] sm:$0xf]
  %v211 = vld [vmem:[%s4 + $0x10] sm:$0xf]
  %v212 = vld [vmem:[%s4 + $0x14] sm:$0xf]
  %v213 = vld [vmem:[%s4 + $0x18] sm:$0xf]
  %v214 = vld [vmem:[%s4 + $0x1c] sm:$0xf]
  %v215 = vld [vmem:[%s4 + $0x20] sm:$0xf]
  %v216 = vld [vmem:[%s4 + $0x24] sm:$0xf]
  %v217 = vld [vmem:[%s4 + $0x28] sm:$0xf]
  %v218 = vld [vmem:[%s4 + $0x2c] sm:$0xf]
  %v219 = vld [vmem:[%s4 + $0x30] sm:$0xf]
  %v220 = vld [vmem:[%s4 + $0x34] sm:$0xf]
  %v221 = vld [vmem:[%s4 + $0x38] sm:$0xf]
  %v222 = vld [vmem:[%s4 + $0x3c] sm:$0xf]
  %v223 = vld [vmem:[%s4 + $0x40] sm:$0xf]
  %v224 = vld [vmem:[%s4 + $0x44] sm:$0xf]
  %v225 = vld [vmem:[%s4 + $0x48] sm:$0xf]
  %v226 = vld [vmem:[%s4 + $0x4c] sm:$0xf]
  %v227 = vld [vmem:[%s4 + $0x50] sm:$0xf]
  %v228 = vld [vmem:[%s4 + $0x54] sm:$0xf]
  %v229 = vld [vmem:[%s4 + $0x58] sm:$0xf]
  %v230 = vld [vmem:[%s4 + $0x5c] sm:$0xf]
  %v231 = vld [vmem:[%s4 + $0x60] sm:$0xf]
  %v232 = vld [vmem:[%s4 + $0x64] sm:$0xf]
  %v233 = vld [vmem:[%s4 + $0x68] sm:$0xf]
  %v234 = vld [vmem:[%s4 + $0x6c] sm:$0xf]
  %v235 = vld [vmem:[%s4 + $0x70] sm:$0xf]
  %v236 = vld [vmem:[%s4 + $0x74] sm:$0xf]
  %v237 = vld [vmem:[%s4 + $0x78] sm:$0xf]
  %v238 = vld [vmem:[%s4 + $0x7c] sm:$0xf]
  %v239 = vld [vmem:[%s5] sm:$0x1]
  %v241 = vlaneseq
  %v242 = vshrl.u32 %v241, 7
  %v243 = vsub.s32 0, %v242
  %v244 = vrot.slane %v239, %v243
  %v278 = vunpack.c.l.b16 %v207
  %v279 = vunpack.c.l.b16 %v208
  %v280 = vunpack.c.l.b16 %v209
  %v281 = vunpack.c.l.b16 %v210
  %v282 = vunpack.c.l.b16 %v211
  %v283 = vunpack.c.l.b16 %v212
  %v284 = vunpack.c.l.b16 %v213
  %v285 = vunpack.c.l.b16 %v214
  %v286 = vunpack.c.l.b16 %v215
  %v287 = vunpack.c.l.b16 %v216
  %v288 = vunpack.c.l.b16 %v217
  %v289 = vunpack.c.l.b16 %v218
  %v290 = vunpack.c.l.b16 %v219
  %v291 = vunpack.c.l.b16 %v220
  %v292 = vunpack.c.l.b16 %v221
  %v293 = vunpack.c.l.b16 %v222
  %v294 = vunpack.c.l.b16 %v223
  %v295 = vunpack.c.l.b16 %v224
  %v296 = vunpack.c.l.b16 %v225
  %v297 = vunpack.c.l.b16 %v226
  %v298 = vunpack.c.l.b16 %v227
  %v299 = vunpack.c.l.b16 %v228
  %v300 = vunpack.c.l.b16 %v229
  %v301 = vunpack.c.l.b16 %v230
  %v302 = vunpack.c.l.b16 %v231
  %v303 = vunpack.c.l.b16 %v232
  %v304 = vunpack.c.l.b16 %v233
  %v305 = vunpack.c.l.b16 %v234
  %v306 = vunpack.c.l.b16 %v235
  %v307 = vunpack.c.l.b16 %v236
  %v308 = vunpack.c.l.b16 %v237
  %v309 = vunpack.c.l.b16 %v238
  %v310 = vpack.c.b16 %v279, %v278
  %v311 = vpack.c.b16 %v281, %v280
  %v312 = vpack.c.b16 %v283, %v282
  %v313 = vpack.c.b16 %v285, %v284
  %v314 = vpack.c.b16 %v287, %v286
  %v315 = vpack.c.b16 %v289, %v288
  %v316 = vpack.c.b16 %v291, %v290
  %v317 = vpack.c.b16 %v293, %v292
  %v318 = vpack.c.b16 %v295, %v294
  %v319 = vpack.c.b16 %v297, %v296
  %v320 = vpack.c.b16 %v299, %v298
  %v321 = vpack.c.b16 %v301, %v300
  %v322 = vpack.c.b16 %v303, %v302
  %v323 = vpack.c.b16 %v305, %v304
  %v324 = vpack.c.b16 %v307, %v306
  %v325 = vpack.c.b16 %v309, %v308
  %342 = vmatprep.subr.bf16.mxu0 0
  %343 = vmatpush1.bf16.msra.mxu0 %v317
  %344 = vmatprep.subr.bf16.mxu0 0
  %345 = vmatpush1.bf16.msra.mxu0 %v316
  %346 = vmatprep.subr.bf16.mxu0 0
  %347 = vmatpush1.bf16.msra.mxu0 %v315
  %348 = vmatprep.subr.bf16.mxu0 0
  %349 = vmatpush1.bf16.msra.mxu0 %v314
  %350 = vmatprep.subr.bf16.mxu0 0
  %351 = vmatpush1.bf16.msra.mxu0 %v313
  %352 = vmatprep.subr.bf16.mxu0 0
  %353 = vmatpush1.bf16.msra.mxu0 %v312
  %354 = vmatprep.subr.bf16.mxu0 0
  %355 = vmatpush1.bf16.msra.mxu0 %v311
  %356 = vmatprep.subr.bf16.mxu0 0
  %357 = vmatpush1.bf16.msra.mxu0 %v310
  %358 = vmatprep.subr.bf16.mxu0 0
  %359 = vmatpush2.bf16.msra.mxu0 %v325
  %360 = vmatprep.subr.bf16.mxu0 0
  %361 = vmatpush2.bf16.msra.mxu0 %v324
  %362 = vmatprep.subr.bf16.mxu0 0
  %363 = vmatpush2.bf16.msra.mxu0 %v323
  %364 = vmatprep.subr.bf16.mxu0 0
  %365 = vmatpush2.bf16.msra.mxu0 %v322
  %366 = vmatprep.subr.bf16.mxu0 0
  %367 = vmatpush2.bf16.msra.mxu0 %v321
  %368 = vmatprep.subr.bf16.mxu0 0
  %369 = vmatpush2.bf16.msra.mxu0 %v320
  %370 = vmatprep.subr.bf16.mxu0 0
  %371 = vmatpush2.bf16.msra.mxu0 %v319
  %372 = vmatprep.subr.bf16.mxu0 0
  %373 = vmatpush2.bf16.msra.mxu0 %v318
  %374 = vmatprep.mubr.bf16.mxu0 %v200
  %375 = vmatmul.mubr.bf16.gmra.mxu0 %v199
  %v376 = vpop.f32.mrf.mxu0
  %v377 = vadd.f32 %v244, %v376
  %v378 = vpop.f32.mrf.mxu0
  %v379 = vpop.f32.mrf.mxu0
  %v380 = vadd.f32 %v244, %v379
  %v381 = vpop.f32.mrf.mxu0
  %382 = vmatprep.mubr.bf16.mxu0 %v202
  %383 = vmatmul.mubr.bf16.gmra.mxu0 %v201
  %v384 = vpop.f32.mrf.mxu0
  %v385 = vadd.f32 %v244, %v384
  %v386 = vpop.f32.mrf.mxu0
  %v387 = vpop.f32.mrf.mxu0
  %v388 = vadd.f32 %v244, %v387
  %v389 = vpop.f32.mrf.mxu0
  %390 = vmatprep.mubr.bf16.mxu0 %v204
  %391 = vmatmul.mubr.bf16.gmra.mxu0 %v203
  %v392 = vpop.f32.mrf.mxu0
  %v393 = vadd.f32 %v244, %v392
  %v394 = vpop.f32.mrf.mxu0
  %v395 = vpop.f32.mrf.mxu0
  %v396 = vadd.f32 %v244, %v395
  %v397 = vpop.f32.mrf.mxu0
  %398 = vmatprep.mubr.bf16.mxu0 %v206
  %399 = vmatmul.mubr.bf16.gmra.mxu0 %v205
  %v400 = vpop.f32.mrf.mxu0
  %v401 = vadd.f32 %v244, %v400
  %v402 = vpop.f32.mrf.mxu0
  %v403 = vpop.f32.mrf.mxu0
  %v404 = vadd.f32 %v244, %v403
  %v405 = vpop.f32.mrf.mxu0
  %406 = vdwg.mxu0
  %v407 = vtanh.pop %v377
  %v408 = vtanh.pop %v380
  %v409 = vtanh.pop %v385
  %v410 = vtanh.pop %v388
  %v411 = vtanh.pop %v393
  %v412 = vtanh.pop %v396
  %v413 = vtanh.pop %v401
  %v414 = vtanh.pop %v404
  %v415 = vld [vmem:[%s6] sm:$0x1]
  %v417 = vlaneseq
  %v418 = vshrl.u32 %v417, 7
  %v419 = vsub.s32 0, %v418
  %v420 = vrot.slane %v415, %v419
  %v422 = vmul.f32 %v407, %v420
  %v423 = vmul.f32 %v408, %v420
  %v424 = vmul.f32 %v409, %v420
  %v425 = vmul.f32 %v410, %v420
  %v426 = vmul.f32 %v411, %v420
  %v427 = vmul.f32 %v412, %v420
  %v428 = vmul.f32 %v413, %v420
  %v429 = vmul.f32 %v414, %v420
  %430 = vadd.xlane.f32.xlu0 %v422
  %v431 = vpop.xlane.xlu0 %430
  %432 = vadd.xlane.f32.xlu0 %v423
  %v433 = vpop.xlane.xlu0 %432
  %434 = vadd.xlane.f32.xlu0 %v424
  %v435 = vpop.xlane.xlu0 %434
  %436 = vadd.xlane.f32.xlu0 %v425
  %v437 = vpop.xlane.xlu0 %436
  %438 = vadd.xlane.f32.xlu0 %v426
  %v439 = vpop.xlane.xlu0 %438
  %440 = vadd.xlane.f32.xlu0 %v427
  %v441 = vpop.xlane.xlu0 %440
  %442 = vadd.xlane.f32.xlu0 %v428
  %v443 = vpop.xlane.xlu0 %442
  %444 = vadd.xlane.f32.xlu0 %v429
  %v445 = vpop.xlane.xlu0 %444
  %v446 = vlaneseq
  %v447 = vshrl.u32 %v446, 7
  %v448 = vld [vmem:[%s1] sm:$0xff]
  %v449 = vcombine.high %v448, %v448
  %v451 = vunpack.c.l.s4 1966171168
  %v452 = vunpack.c.0.s8 %v451
  %v453 = vlaneseq
  %v454 = vshrl.u32 %v453, 7
  %v455 = vsub.s32 %v452, %v454
  %v456 = vrot.slane %v448, %v455
  %v458 = vunpack.c.l.s4 1966171168
  %v459 = vunpack.c.0.s8 %v458
  %v460 = vlaneseq
  %v461 = vshrl.u32 %v460, 7
  %v462 = vsub.s32 %v459, %v461
  %v463 = vrot.slane %v449, %v462
  %v464 = vcombine.high %v456, %v456
  %v465 = vcombine.high %v463, %v463
  %v467 = vunpack.c.l.s4 1966171168
  %v468 = vunpack.c.0.s8 %v467
  %v469 = vlaneseq
  %v470 = vshrl.u32 %v469, 7
  %v471 = vsub.s32 %v468, %v470
  %v472 = vrot.slane %v456, %v471
  %v474 = vunpack.c.l.s4 1966171168
  %v475 = vunpack.c.0.s8 %v474
  %v476 = vlaneseq
  %v477 = vshrl.u32 %v476, 7
  %v478 = vsub.s32 %v475, %v477
  %v479 = vrot.slane %v463, %v478
  %v481 = vunpack.c.l.s4 1966171168
  %v482 = vunpack.c.0.s8 %v481
  %v483 = vlaneseq
  %v484 = vshrl.u32 %v483, 7
  %v485 = vsub.s32 %v482, %v484
  %v486 = vrot.slane %v464, %v485
  %v488 = vunpack.c.l.s4 1966171168
  %v489 = vunpack.c.0.s8 %v488
  %v490 = vlaneseq
  %v491 = vshrl.u32 %v490, 7
  %v492 = vsub.s32 %v489, %v491
  %v493 = vrot.slane %v465, %v492
  %v494 = vcombine.high %v472, %v472
  %v495 = vcombine.high %v479, %v479
  %v496 = vcombine.high %v486, %v486
  %v497 = vcombine.high %v493, %v493
  %v498 = vlaneseq
  %v499 = vshrl.u32 %v498, 7
  %v500 = vsub.s32 0, %v499
  %v501 = vrot.slane %v472, %v500
  %v502 = vlaneseq
  %v503 = vshrl.u32 %v502, 7
  %v504 = vsub.s32 0, %v503
  %v505 = vrot.slane %v486, %v504
  %v506 = vlaneseq
  %v507 = vshrl.u32 %v506, 7
  %v508 = vsub.s32 0, %v507
  %v509 = vrot.slane %v494, %v508
  %v510 = vlaneseq
  %v511 = vshrl.u32 %v510, 7
  %v512 = vsub.s32 0, %v511
  %v513 = vrot.slane %v496, %v512
  %v514 = vlaneseq
  %v515 = vshrl.u32 %v514, 7
  %v516 = vsub.s32 0, %v515
  %v517 = vrot.slane %v479, %v516
  %v518 = vlaneseq
  %v519 = vshrl.u32 %v518, 7
  %v520 = vsub.s32 0, %v519
  %v521 = vrot.slane %v493, %v520
  %v522 = vlaneseq
  %v523 = vshrl.u32 %v522, 7
  %v524 = vsub.s32 0, %v523
  %v525 = vrot.slane %v495, %v524
  %v526 = vlaneseq
  %v527 = vshrl.u32 %v526, 7
  %v528 = vsub.s32 0, %v527
  %v529 = vrot.slane %v497, %v528
  %vm530 = vcmp.lt.s32.totalorder %v447, %v501
  %vm531 = vcmp.lt.s32.totalorder %v447, %v505
  %vm532 = vcmp.lt.s32.totalorder %v447, %v509
  %vm533 = vcmp.lt.s32.totalorder %v447, %v513
  %vm534 = vcmp.lt.s32.totalorder %v447, %v517
  %vm535 = vcmp.lt.s32.totalorder %v447, %v521
  %vm536 = vcmp.lt.s32.totalorder %v447, %v525
  %vm537 = vcmp.lt.s32.totalorder %v447, %v529
  %v538 = vsel %vm530, %v431, -1e+10
  %v539 = vsel %vm531, %v433, -1e+10
  %v540 = vsel %vm532, %v435, -1e+10
  %v541 = vsel %vm533, %v437, -1e+10
  %v542 = vsel %vm534, %v439, -1e+10
  %v543 = vsel %vm535, %v441, -1e+10
  %v544 = vsel %vm536, %v443, -1e+10
  %v545 = vsel %vm537, %v445, -1e+10
  %vm546 = vcmask 7168
  %v547 = vsel %vm546, %v538, -inf
  %v548 = vrot.slane %v547, 4
  %v549 = vmax.f32 %v547, %v548
  %v550 = vrot.slane %v549, 2
  %v551 = vmax.f32 %v549, %v550
  %v552 = vrot.slane %v551, 1
  %v553 = vmax.f32 %v551, %v552
  %v554 = vsel %vm546, %v539, -inf
  %v555 = vrot.slane %v554, 4
  %v556 = vmax.f32 %v554, %v555
  %v557 = vrot.slane %v556, 2
  %v558 = vmax.f32 %v556, %v557
  %v559 = vrot.slane %v558, 1
  %v560 = vmax.f32 %v558, %v559
  %v561 = vsel %vm546, %v540, -inf
  %v562 = vrot.slane %v561, 4
  %v563 = vmax.f32 %v561, %v562
  %v564 = vrot.slane %v563, 2
  %v565 = vmax.f32 %v563, %v564
  %v566 = vrot.slane %v565, 1
  %v567 = vmax.f32 %v565, %v566
  %v568 = vsel %vm546, %v541, -inf
  %v569 = vrot.slane %v568, 4
  %v570 = vmax.f32 %v568, %v569
  %v571 = vrot.slane %v570, 2
  %v572 = vmax.f32 %v570, %v571
  %v573 = vrot.slane %v572, 1
  %v574 = vmax.f32 %v572, %v573
  %v575 = vsel %vm546, %v542, -inf
  %v576 = vrot.slane %v575, 4
  %v577 = vmax.f32 %v575, %v576
  %v578 = vrot.slane %v577, 2
  %v579 = vmax.f32 %v577, %v578
  %v580 = vrot.slane %v579, 1
  %v581 = vmax.f32 %v579, %v580
  %v582 = vsel %vm546, %v543, -inf
  %v583 = vrot.slane %v582, 4
  %v584 = vmax.f32 %v582, %v583
  %v585 = vrot.slane %v584, 2
  %v586 = vmax.f32 %v584, %v585
  %v587 = vrot.slane %v586, 1
  %v588 = vmax.f32 %v586, %v587
  %v589 = vsel %vm546, %v544, -inf
  %v590 = vrot.slane %v589, 4
  %v591 = vmax.f32 %v589, %v590
  %v592 = vrot.slane %v591, 2
  %v593 = vmax.f32 %v591, %v592
  %v594 = vrot.slane %v593, 1
  %v595 = vmax.f32 %v593, %v594
  %v596 = vsel %vm546, %v545, -inf
  %v597 = vrot.slane %v596, 4
  %v598 = vmax.f32 %v596, %v597
  %v599 = vrot.slane %v598, 2
  %v600 = vmax.f32 %v598, %v599
  %v601 = vrot.slane %v600, 1
  %v602 = vmax.f32 %v600, %v601
  %v603 = vsub.f32 %v538, %v553
  %v604 = vsub.f32 %v539, %v560
  %v605 = vsub.f32 %v540, %v567
  %v606 = vsub.f32 %v541, %v574
  %v607 = vsub.f32 %v542, %v581
  %v608 = vsub.f32 %v543, %v588
  %v609 = vsub.f32 %v544, %v595
  %v610 = vsub.f32 %v545, %v602
  %v611 = vmul.f32 %v603, 1.442695
  %v612 = vpow.pop %v611
  %v613 = vmul.f32 %v604, 1.442695
  %v614 = vpow.pop %v613
  %v615 = vmul.f32 %v605, 1.442695
  %v616 = vpow.pop %v615
  %v617 = vmul.f32 %v606, 1.442695
  %v618 = vpow.pop %v617
  %v619 = vmul.f32 %v607, 1.442695
  %v620 = vpow.pop %v619
  %v621 = vmul.f32 %v608, 1.442695
  %v622 = vpow.pop %v621
  %v623 = vmul.f32 %v609, 1.442695
  %v624 = vpow.pop %v623
  %v625 = vmul.f32 %v610, 1.442695
  %v626 = vpow.pop %v625
  %v627 = vsel %vm546, %v612, 0.0
  %v628 = vrot.slane %v627, 4
  %v629 = vadd.f32 %v627, %v628
  %v630 = vrot.slane %v629, 2
  %v631 = vadd.f32 %v629, %v630
  %v632 = vrot.slane %v631, 1
  %v633 = vadd.f32 %v631, %v632
  %v634 = vsel %vm546, %v614, 0.0
  %v635 = vrot.slane %v634, 4
  %v636 = vadd.f32 %v634, %v635
  %v637 = vrot.slane %v636, 2
  %v638 = vadd.f32 %v636, %v637
  %v639 = vrot.slane %v638, 1
  %v640 = vadd.f32 %v638, %v639
  %v641 = vsel %vm546, %v616, 0.0
  %v642 = vrot.slane %v641, 4
  %v643 = vadd.f32 %v641, %v642
  %v644 = vrot.slane %v643, 2
  %v645 = vadd.f32 %v643, %v644
  %v646 = vrot.slane %v645, 1
  %v647 = vadd.f32 %v645, %v646
  %v648 = vsel %vm546, %v618, 0.0
  %v649 = vrot.slane %v648, 4
  %v650 = vadd.f32 %v648, %v649
  %v651 = vrot.slane %v650, 2
  %v652 = vadd.f32 %v650, %v651
  %v653 = vrot.slane %v652, 1
  %v654 = vadd.f32 %v652, %v653
  %v655 = vsel %vm546, %v620, 0.0
  %v656 = vrot.slane %v655, 4
  %v657 = vadd.f32 %v655, %v656
  %v658 = vrot.slane %v657, 2
  %v659 = vadd.f32 %v657, %v658
  %v660 = vrot.slane %v659, 1
  %v661 = vadd.f32 %v659, %v660
  %v662 = vsel %vm546, %v622, 0.0
  %v663 = vrot.slane %v662, 4
  %v664 = vadd.f32 %v662, %v663
  %v665 = vrot.slane %v664, 2
  %v666 = vadd.f32 %v664, %v665
  %v667 = vrot.slane %v666, 1
  %v668 = vadd.f32 %v666, %v667
  %v669 = vsel %vm546, %v624, 0.0
  %v670 = vrot.slane %v669, 4
  %v671 = vadd.f32 %v669, %v670
  %v672 = vrot.slane %v671, 2
  %v673 = vadd.f32 %v671, %v672
  %v674 = vrot.slane %v673, 1
  %v675 = vadd.f32 %v673, %v674
  %v676 = vsel %vm546, %v626, 0.0
  %v677 = vrot.slane %v676, 4
  %v678 = vadd.f32 %v676, %v677
  %v679 = vrot.slane %v678, 2
  %v680 = vadd.f32 %v678, %v679
  %v681 = vrot.slane %v680, 1
  %v682 = vadd.f32 %v680, %v681
  %v683 = vrcp.pop %v633
  %v684 = vrcp.pop %v640
  %v685 = vrcp.pop %v647
  %v686 = vrcp.pop %v654
  %v687 = vrcp.pop %v661
  %v688 = vrcp.pop %v668
  %v689 = vrcp.pop %v675
  %v690 = vrcp.pop %v682
  %v691 = vmul.f32 %v612, %v683
  %v692 = vmul.f32 %v614, %v684
  %v693 = vmul.f32 %v616, %v685
  %v694 = vmul.f32 %v618, %v686
  %v695 = vmul.f32 %v620, %v687
  %v696 = vmul.f32 %v622, %v688
  %v697 = vmul.f32 %v624, %v689
  %v698 = vmul.f32 %v626, %v690
  %700 = vset.pattern.permute.xlu0 0
  %701 = vperm.xlu0 %700, %v691
  %v702 = vpop.permute.xlu0 %701
  %705 = vset.pattern.permute.xlu0 0
  %706 = vperm.xlu0 %705, %v692
  %v707 = vpop.permute.xlu0 %706
  %710 = vset.pattern.permute.xlu0 0
  %711 = vperm.xlu0 %710, %v693
  %v712 = vpop.permute.xlu0 %711
  %715 = vset.pattern.permute.xlu0 0
  %716 = vperm.xlu0 %715, %v694
  %v717 = vpop.permute.xlu0 %716
  %720 = vset.pattern.permute.xlu0 0
  %721 = vperm.xlu0 %720, %v695
  %v722 = vpop.permute.xlu0 %721
  %725 = vset.pattern.permute.xlu0 0
  %726 = vperm.xlu0 %725, %v696
  %v727 = vpop.permute.xlu0 %726
  %730 = vset.pattern.permute.xlu0 0
  %731 = vperm.xlu0 %730, %v697
  %v732 = vpop.permute.xlu0 %731
  %735 = vset.pattern.permute.xlu0 0
  %736 = vperm.xlu0 %735, %v698
  %v737 = vpop.permute.xlu0 %736
  %v739 = vmul.f32 %v702, %v183
  %v740 = vmul.f32 %v702, %v184
  %v741 = vmul.f32 %v707, %v185
  %v742 = vmul.f32 %v707, %v186
  %v743 = vmul.f32 %v712, %v187
  %v744 = vmul.f32 %v712, %v188
  %v745 = vmul.f32 %v717, %v189
  %v746 = vmul.f32 %v717, %v190
  %v747 = vmul.f32 %v722, %v191
  %v748 = vmul.f32 %v722, %v192
  %v749 = vmul.f32 %v727, %v193
  %v750 = vmul.f32 %v727, %v194
  %v751 = vmul.f32 %v732, %v195
  %v752 = vmul.f32 %v732, %v196
  %v753 = vmul.f32 %v737, %v197
  %v754 = vmul.f32 %v737, %v198
  %v755 = vrot.slane %v739, 4
  %v756 = vadd.f32 %v739, %v755
  %v757 = vrot.slane %v756, 2
  %v758 = vadd.f32 %v756, %v757
  %v759 = vrot.slane %v758, 1
  %v760 = vadd.f32 %v758, %v759
  %v761 = vrot.slane %v740, 4
  %v762 = vadd.f32 %v740, %v761
  %v763 = vrot.slane %v762, 2
  %v764 = vadd.f32 %v762, %v763
  %v765 = vrot.slane %v764, 1
  %v766 = vadd.f32 %v764, %v765
  %v767 = vrot.slane %v741, 4
  %v768 = vadd.f32 %v741, %v767
  %v769 = vrot.slane %v768, 2
  %v770 = vadd.f32 %v768, %v769
  %v771 = vrot.slane %v770, 1
  %v772 = vadd.f32 %v770, %v771
  %v773 = vrot.slane %v742, 4
  %v774 = vadd.f32 %v742, %v773
  %v775 = vrot.slane %v774, 2
  %v776 = vadd.f32 %v774, %v775
  %v777 = vrot.slane %v776, 1
  %v778 = vadd.f32 %v776, %v777
  %v779 = vrot.slane %v743, 4
  %v780 = vadd.f32 %v743, %v779
  %v781 = vrot.slane %v780, 2
  %v782 = vadd.f32 %v780, %v781
  %v783 = vrot.slane %v782, 1
  %v784 = vadd.f32 %v782, %v783
  %v785 = vrot.slane %v744, 4
  %v786 = vadd.f32 %v744, %v785
  %v787 = vrot.slane %v786, 2
  %v788 = vadd.f32 %v786, %v787
  %v789 = vrot.slane %v788, 1
  %v790 = vadd.f32 %v788, %v789
  %v791 = vrot.slane %v745, 4
  %v792 = vadd.f32 %v745, %v791
  %v793 = vrot.slane %v792, 2
  %v794 = vadd.f32 %v792, %v793
  %v795 = vrot.slane %v794, 1
  %v796 = vadd.f32 %v794, %v795
  %v797 = vrot.slane %v746, 4
  %v798 = vadd.f32 %v746, %v797
  %v799 = vrot.slane %v798, 2
  %v800 = vadd.f32 %v798, %v799
  %v801 = vrot.slane %v800, 1
  %v802 = vadd.f32 %v800, %v801
  %v803 = vrot.slane %v747, 4
  %v804 = vadd.f32 %v747, %v803
  %v805 = vrot.slane %v804, 2
  %v806 = vadd.f32 %v804, %v805
  %v807 = vrot.slane %v806, 1
  %v808 = vadd.f32 %v806, %v807
  %v809 = vrot.slane %v748, 4
  %v810 = vadd.f32 %v748, %v809
  %v811 = vrot.slane %v810, 2
  %v812 = vadd.f32 %v810, %v811
  %v813 = vrot.slane %v812, 1
  %v814 = vadd.f32 %v812, %v813
  %v815 = vrot.slane %v749, 4
  %v816 = vadd.f32 %v749, %v815
  %v817 = vrot.slane %v816, 2
  %v818 = vadd.f32 %v816, %v817
  %v819 = vrot.slane %v818, 1
  %v820 = vadd.f32 %v818, %v819
  %v821 = vrot.slane %v750, 4
  %v822 = vadd.f32 %v750, %v821
  %v823 = vrot.slane %v822, 2
  %v824 = vadd.f32 %v822, %v823
  %v825 = vrot.slane %v824, 1
  %v826 = vadd.f32 %v824, %v825
  %v827 = vrot.slane %v751, 4
  %v828 = vadd.f32 %v751, %v827
  %v829 = vrot.slane %v828, 2
  %v830 = vadd.f32 %v828, %v829
  %v831 = vrot.slane %v830, 1
  %v832 = vadd.f32 %v830, %v831
  %v833 = vrot.slane %v752, 4
  %v834 = vadd.f32 %v752, %v833
  %v835 = vrot.slane %v834, 2
  %v836 = vadd.f32 %v834, %v835
  %v837 = vrot.slane %v836, 1
  %v838 = vadd.f32 %v836, %v837
  %v839 = vrot.slane %v753, 4
  %v840 = vadd.f32 %v753, %v839
  %v841 = vrot.slane %v840, 2
  %v842 = vadd.f32 %v840, %v841
  %v843 = vrot.slane %v842, 1
  %v844 = vadd.f32 %v842, %v843
  %v845 = vrot.slane %v754, 4
  %v846 = vadd.f32 %v754, %v845
  %v847 = vrot.slane %v846, 2
  %v848 = vadd.f32 %v846, %v847
  %v849 = vrot.slane %v848, 1
  %v850 = vadd.f32 %v848, %v849
  %v851 = vpack.c.bf16 %v760, %v760
  %v852 = vpack.c.bf16 %v766, %v766
  %v853 = vpack.c.bf16 %v772, %v772
  %v854 = vpack.c.bf16 %v778, %v778
  %v855 = vpack.c.bf16 %v784, %v784
  %v856 = vpack.c.bf16 %v790, %v790
  %v857 = vpack.c.bf16 %v796, %v796
  %v858 = vpack.c.bf16 %v802, %v802
  %v859 = vpack.c.bf16 %v808, %v808
  %v860 = vpack.c.bf16 %v814, %v814
  %v861 = vpack.c.bf16 %v820, %v820
  %v862 = vpack.c.bf16 %v826, %v826
  %v863 = vpack.c.bf16 %v832, %v832
  %v864 = vpack.c.bf16 %v838, %v838
  %v865 = vpack.c.bf16 %v844, %v844
  %v866 = vpack.c.bf16 %v850, %v850
  %v867 = vld [vmem:[%s7] sm:$0xf]
  %v868 = vld [vmem:[%s7 + $0x4] sm:$0xf]
  %v869 = vld [vmem:[%s7 + $0x8] sm:$0xf]
  %v870 = vld [vmem:[%s7 + $0xc] sm:$0xf]
  %v871 = vld [vmem:[%s7 + $0x10] sm:$0xf]
  %v872 = vld [vmem:[%s7 + $0x14] sm:$0xf]
  %v873 = vld [vmem:[%s7 + $0x18] sm:$0xf]
  %v874 = vld [vmem:[%s7 + $0x1c] sm:$0xf]
  %v875 = vld [vmem:[%s7 + $0x20] sm:$0xf]
  %v876 = vld [vmem:[%s7 + $0x24] sm:$0xf]
  %v877 = vld [vmem:[%s7 + $0x28] sm:$0xf]
  %v878 = vld [vmem:[%s7 + $0x2c] sm:$0xf]
  %v879 = vld [vmem:[%s7 + $0x30] sm:$0xf]
  %v880 = vld [vmem:[%s7 + $0x34] sm:$0xf]
  %v881 = vld [vmem:[%s7 + $0x38] sm:$0xf]
  %v882 = vld [vmem:[%s7 + $0x3c] sm:$0xf]
  %v883 = vld [vmem:[%s7 + $0x40] sm:$0xf]
  %v884 = vld [vmem:[%s7 + $0x44] sm:$0xf]
  %v885 = vld [vmem:[%s7 + $0x48] sm:$0xf]
  %v886 = vld [vmem:[%s7 + $0x4c] sm:$0xf]
  %v887 = vld [vmem:[%s7 + $0x50] sm:$0xf]
  %v888 = vld [vmem:[%s7 + $0x54] sm:$0xf]
  %v889 = vld [vmem:[%s7 + $0x58] sm:$0xf]
  %v890 = vld [vmem:[%s7 + $0x5c] sm:$0xf]
  %v891 = vld [vmem:[%s7 + $0x60] sm:$0xf]
  %v892 = vld [vmem:[%s7 + $0x64] sm:$0xf]
  %v893 = vld [vmem:[%s7 + $0x68] sm:$0xf]
  %v894 = vld [vmem:[%s7 + $0x6c] sm:$0xf]
  %v895 = vld [vmem:[%s7 + $0x70] sm:$0xf]
  %v896 = vld [vmem:[%s7 + $0x74] sm:$0xf]
  %v897 = vld [vmem:[%s7 + $0x78] sm:$0xf]
  %v898 = vld [vmem:[%s7 + $0x7c] sm:$0xf]
  %v899 = vld [vmem:[%s8] sm:$0x1]
  %v901 = vlaneseq
  %v902 = vshrl.u32 %v901, 7
  %v903 = vsub.s32 0, %v902
  %v904 = vrot.slane %v899, %v903
  %v922 = vunpack.c.l.b16 %v851
  %v923 = vunpack.c.l.b16 %v852
  %v924 = vunpack.c.l.b16 %v853
  %v925 = vunpack.c.l.b16 %v854
  %v926 = vunpack.c.l.b16 %v855
  %v927 = vunpack.c.l.b16 %v856
  %v928 = vunpack.c.l.b16 %v857
  %v929 = vunpack.c.l.b16 %v858
  %v930 = vunpack.c.l.b16 %v859
  %v931 = vunpack.c.l.b16 %v860
  %v932 = vunpack.c.l.b16 %v861
  %v933 = vunpack.c.l.b16 %v862
  %v934 = vunpack.c.l.b16 %v863
  %v935 = vunpack.c.l.b16 %v864
  %v936 = vunpack.c.l.b16 %v865
  %v937 = vunpack.c.l.b16 %v866
  %vm938 = vcmask 1041409
  %v939 = vsel %vm938, %v924, %v922
  %vm940 = vcmask 1042434
  %v941 = vsel %vm940, %v926, %v939
  %vm942 = vcmask 1043459
  %v943 = vsel %vm942, %v928, %v941
  %vm944 = vcmask 1044484
  %v945 = vsel %vm944, %v930, %v943
  %vm946 = vcmask 1045509
  %v947 = vsel %vm946, %v932, %v945
  %vm948 = vcmask 1046534
  %v949 = vsel %vm948, %v934, %v947
  %vm950 = vcmask 1047559
  %v951 = vsel %vm950, %v936, %v949
  %v952 = vsel %vm938, %v925, %v923
  %v953 = vsel %vm940, %v927, %v952
  %v954 = vsel %vm942, %v929, %v953
  %v955 = vsel %vm944, %v931, %v954
  %v956 = vsel %vm946, %v933, %v955
  %v957 = vsel %vm948, %v935, %v956
  %v958 = vsel %vm950, %v937, %v957
  %v959 = vpack.c.b16 %v951, %v951
  %v960 = vpack.c.b16 %v958, %v958
  %v995 = vunpack.c.l.b16 %v867
  %v996 = vunpack.c.l.b16 %v868
  %v997 = vunpack.c.l.b16 %v869
  %v998 = vunpack.c.l.b16 %v870
  %v999 = vunpack.c.l.b16 %v871
  %v1000 = vunpack.c.l.b16 %v872
  %v1001 = vunpack.c.l.b16 %v873
  %v1002 = vunpack.c.l.b16 %v874
  %v1003 = vunpack.c.l.b16 %v875
  %v1004 = vunpack.c.l.b16 %v876
  %v1005 = vunpack.c.l.b16 %v877
  %v1006 = vunpack.c.l.b16 %v878
  %v1007 = vunpack.c.l.b16 %v879
  %v1008 = vunpack.c.l.b16 %v880
  %v1009 = vunpack.c.l.b16 %v881
  %v1010 = vunpack.c.l.b16 %v882
  %v1011 = vunpack.c.l.b16 %v883
  %v1012 = vunpack.c.l.b16 %v884
  %v1013 = vunpack.c.l.b16 %v885
  %v1014 = vunpack.c.l.b16 %v886
  %v1015 = vunpack.c.l.b16 %v887
  %v1016 = vunpack.c.l.b16 %v888
  %v1017 = vunpack.c.l.b16 %v889
  %v1018 = vunpack.c.l.b16 %v890
  %v1019 = vunpack.c.l.b16 %v891
  %v1020 = vunpack.c.l.b16 %v892
  %v1021 = vunpack.c.l.b16 %v893
  %v1022 = vunpack.c.l.b16 %v894
  %v1023 = vunpack.c.l.b16 %v895
  %v1024 = vunpack.c.l.b16 %v896
  %v1025 = vunpack.c.l.b16 %v897
  %v1026 = vunpack.c.l.b16 %v898
  %v1027 = vpack.c.b16 %v996, %v995
  %v1028 = vpack.c.b16 %v998, %v997
  %v1029 = vpack.c.b16 %v1000, %v999
  %v1030 = vpack.c.b16 %v1002, %v1001
  %v1031 = vpack.c.b16 %v1004, %v1003
  %v1032 = vpack.c.b16 %v1006, %v1005
  %v1033 = vpack.c.b16 %v1008, %v1007
  %v1034 = vpack.c.b16 %v1010, %v1009
  %v1035 = vpack.c.b16 %v1012, %v1011
  %v1036 = vpack.c.b16 %v1014, %v1013
  %v1037 = vpack.c.b16 %v1016, %v1015
  %v1038 = vpack.c.b16 %v1018, %v1017
  %v1039 = vpack.c.b16 %v1020, %v1019
  %v1040 = vpack.c.b16 %v1022, %v1021
  %v1041 = vpack.c.b16 %v1024, %v1023
  %v1042 = vpack.c.b16 %v1026, %v1025
  %1059 = vmatprep.subr.bf16.mxu0 0
  %1060 = vmatpush1.bf16.msra.mxu0 %v1034
  %1061 = vmatprep.subr.bf16.mxu0 0
  %1062 = vmatpush1.bf16.msra.mxu0 %v1033
  %1063 = vmatprep.subr.bf16.mxu0 0
  %1064 = vmatpush1.bf16.msra.mxu0 %v1032
  %1065 = vmatprep.subr.bf16.mxu0 0
  %1066 = vmatpush1.bf16.msra.mxu0 %v1031
  %1067 = vmatprep.subr.bf16.mxu0 0
  %1068 = vmatpush1.bf16.msra.mxu0 %v1030
  %1069 = vmatprep.subr.bf16.mxu0 0
  %1070 = vmatpush1.bf16.msra.mxu0 %v1029
  %1071 = vmatprep.subr.bf16.mxu0 0
  %1072 = vmatpush1.bf16.msra.mxu0 %v1028
  %1073 = vmatprep.subr.bf16.mxu0 0
  %1074 = vmatpush1.bf16.msra.mxu0 %v1027
  %1075 = vmatprep.subr.bf16.mxu0 0
  %1076 = vmatpush2.bf16.msra.mxu0 %v1042
  %1077 = vmatprep.subr.bf16.mxu0 0
  %1078 = vmatpush2.bf16.msra.mxu0 %v1041
  %1079 = vmatprep.subr.bf16.mxu0 0
  %1080 = vmatpush2.bf16.msra.mxu0 %v1040
  %1081 = vmatprep.subr.bf16.mxu0 0
  %1082 = vmatpush2.bf16.msra.mxu0 %v1039
  %1083 = vmatprep.subr.bf16.mxu0 0
  %1084 = vmatpush2.bf16.msra.mxu0 %v1038
  %1085 = vmatprep.subr.bf16.mxu0 0
  %1086 = vmatpush2.bf16.msra.mxu0 %v1037
  %1087 = vmatprep.subr.bf16.mxu0 0
  %1088 = vmatpush2.bf16.msra.mxu0 %v1036
  %1089 = vmatprep.subr.bf16.mxu0 0
  %1090 = vmatpush2.bf16.msra.mxu0 %v1035
  %1091 = vmatprep.mubr.bf16.mxu0 %v960
  %1092 = vmatmul.mubr.bf16.gmra.mxu0 %v959
  %v1093 = vpop.f32.mrf.mxu0
  %v1094 = vadd.f32 %v904, %v1093
  %v1095 = vpop.f32.mrf.mxu0
  %v1096 = vpop.f32.mrf.mxu0
  %v1097 = vpop.f32.mrf.mxu0
  %1098 = vdwg.mxu0
  %v1099 = vsub.f32 0.0, %v1094
  %v1100 = vmul.f32 %v1099, 1.442695
  %v1101 = vpow.pop %v1100
  %v1102 = vadd.f32 %v1101, 1.0
  %v1103 = vrcp.pop %v1102
  %v1104 = vmul.f32 1.0, %v1103
  %vm1105 = vcmask 31744
  %1106 = vst.msk [vmem:[%s9] sm:$0xff] %vm1105, %v1104
  // Predicated region
  $region38: #{tpu_custom_call.1} parent=0 // pred_check
    _
  $region39: #{tpu_custom_call.1} parent=0 // pred_check_branch
    %1108 = sbr.rel (0) target = $region41
  $region40: #{tpu_custom_call.1} parent=0 // pred_region
    _
  $region41: #{tpu_custom_call.1} parent=0 // pred_fallthru
    _
  // Predicated region
  $region42: #{tpu_custom_call.1} parent=0 // pred_check
    _
  $region43: #{tpu_custom_call.1} parent=0 // pred_check_branch
    %1110 = sbr.rel (0) target = $region45
  $region44: #{tpu_custom_call.1} parent=0 // pred_region
    _
  $region45: #{tpu_custom_call.1} parent=0 // pred_fallthru
    _

</llo_original>
